<compile_context>
chip_gen: v7x
topology: tpu7x:2x2x1
jax: 0.10.0
libtpu: 0.0.40
codegen_flags: <defaults>
</compile_context>

<pallas_src>
import functools
import math

import jax
import jax.numpy as jnp
from jax.experimental import pallas as pl
from jax.experimental.pallas import tpu as pltpu

LANE = 128  # pad every feature dim to a multiple of the 128-wide lane axis


# ----------------------------- small helpers --------------------------------
def _round_up(v, m):
    return ((v + m - 1) // m) * m


def _pad2d(a, rows, cols):
    pr, pc = rows - a.shape[0], cols - a.shape[1]
    if pr == 0 and pc == 0:
        return a
    return jnp.pad(a, ((0, pr), (0, pc)))


def _vmem_budget_bytes():
    """Generation-aware VMEM budget: ~85% of physical VMEM (leaves headroom for
    compiler scratch / semaphores).  ≈54 MiB on v7x, ≈109 MiB on v5e/v6e."""
    cap = 64 * 1024 * 1024  # conservative default (v7x)
    try:
        info = pltpu.get_tpu_info()
        c = getattr(info, "vmem_capacity_bytes", None)
        if c:
            cap = int(c)
    except Exception:
        pass
    return int(cap * 0.85)


def _vmem_limit(need_bytes, budget):
    return int(min(budget, max(2 * need_bytes, 32 * 1024 * 1024)))


def _row_tile(n):
    # Keep >=2 row tiles whenever possible so both v7x TensorCores get work.
    for t in (512, 256, 128):
        if n >= 2 * t:
            return t
    return 128


def _k_tile(n_pad):
    # Decoupled, large reduction tile (amortizes per-grid-step overhead).
    for t in (2048, 1024, 512, 256, 128):
        if t <= n_pad and n_pad % t == 0:
            return t
    return n_pad


# ----------------------------- kernels --------------------------------------
def _fused_kernel(*refs):
    """Whole 5-layer forward with every operand VMEM-resident.

    refs = (adj, x, W1, b1, ..., WL, bL, out).  adj is read from HBM exactly
    once; all intermediate activations stay in VMEM.
    """
    adj_ref, x_ref = refs[0], refs[1]
    o_ref = refs[-1]
    wb = refs[2:-1]
    n_layers = len(wb) // 2

    adj = adj_ref[...]          # bf16
    h = x_ref[...]              # bf16
    for l in range(n_layers):
        w = wb[2 * l][...]      # bf16
        b = wb[2 * l + 1][...]  # f32
        s = jnp.dot(h, w, preferred_element_type=jnp.float32).astype(jnp.bfloat16)
        z = jnp.dot(adj, s, preferred_element_type=jnp.float32) + b
        if l + 1 < n_layers:
            h = jnp.maximum(z, 0.0).astype(jnp.bfloat16)
        else:
            # Exact sigmoid (this is the model output, not an internal normalizer).
            o_ref[...] = (1.0 / (1.0 + jnp.exp(-z))).astype(o_ref.dtype)


def _dense_kernel(x_ref, w_ref, o_ref):
    # o = x @ W   (bf16 x bf16, f32 accumulation on the MXU)
    o_ref[...] = jnp.dot(x_ref[...], w_ref[...],
                         preferred_element_type=jnp.float32).astype(o_ref.dtype)


def _agg_kernel(adj_ref, s_ref, b_ref, wn_ref, o_ref, acc_ref, *, tk):
    """o = relu(adj @ s + b) @ W_next, reduced over the k (adj-column) grid axis.

    s_ref is the FULL support matrix, VMEM-resident; we slice the k-chunk
    in-kernel so s is never re-streamed from HBM per row tile."""
    k = pl.program_id(1)

    @pl.when(k == 0)
    def _init():
        acc_ref[...] = jnp.zeros_like(acc_ref)

    start = pl.multiple_of(k * tk, tk)
    acc_ref[...] += jnp.dot(adj_ref[...], s_ref[pl.ds(start, tk), :],
                            preferred_element_type=jnp.float32)

    @pl.when(k == pl.num_programs(1) - 1)
    def _epilogue():
        h = jnp.maximum(acc_ref[...] + b_ref[...].astype(jnp.float32), 0.0)
        o_ref[...] = jnp.dot(h.astype(jnp.bfloat16), wn_ref[...],
                             preferred_element_type=jnp.float32).astype(o_ref.dtype)


def _agg_final_kernel(adj_ref, s_ref, b_ref, o_ref, acc_ref, *, tk):
    """o = sigmoid(adj @ s + b), reduced over the k grid axis."""
    k = pl.program_id(1)

    @pl.when(k == 0)
    def _init():
        acc_ref[...] = jnp.zeros_like(acc_ref)

    start = pl.multiple_of(k * tk, tk)
    acc_ref[...] += jnp.dot(adj_ref[...], s_ref[pl.ds(start, tk), :],
                            preferred_element_type=jnp.float32)

    @pl.when(k == pl.num_programs(1) - 1)
    def _epilogue():
        z = acc_ref[...] + b_ref[...].astype(jnp.float32)
        o_ref[...] = (1.0 / (1.0 + jnp.exp(-z))).astype(o_ref.dtype)


# ----------------------------- launch helpers -------------------------------
def _dense(x, w, tm, budget):
    n, fi = x.shape
    fo = w.shape[1]
    need = 2 * (tm * fi + fi * fo + tm * fo) * 2  # double-buffered bf16 blocks
    return pl.pallas_call(
        _dense_kernel,
        out_shape=jax.ShapeDtypeStruct((n, fo), jnp.bfloat16),
        grid_spec=pltpu.PrefetchScalarGridSpec(
            num_scalar_prefetch=0,
            grid=(n // tm,),
            in_specs=[pl.BlockSpec((tm, fi), lambda i: (i, 0)),
                      pl.BlockSpec((fi, fo), lambda i: (0, 0))],
            out_specs=pl.BlockSpec((tm, fo), lambda i: (i, 0)),
        ),
        compiler_params=pltpu.CompilerParams(
            dimension_semantics=(pltpu.PARALLEL,),
            vmem_limit_bytes=_vmem_limit(need, budget)),
        cost_estimate=pl.CostEstimate(
            flops=int(2 * n * fi * fo), transcendentals=0,
            bytes_accessed=int(2 * (n * fi + fi * fo) + 2 * n * fo)),
    )(x, w)


def _aggregate(adj, s, b, w_next, tm, tk, budget, *, final):
    n = adj.shape[0]
    f = s.shape[1]
    if final:
        kernel = functools.partial(_agg_final_kernel, tk=tk)
        fo, out_dtype, out_bytes = f, jnp.float32, 4
    else:
        kernel = functools.partial(_agg_kernel, tk=tk)
        fo, out_dtype, out_bytes = w_next.shape[1], jnp.bfloat16, 2

    in_specs = [
        pl.BlockSpec((tm, tk), lambda i, k: (i, k)),   # adjacency tile (decoupled tm/tk)
        pl.BlockSpec((n, f), lambda i, k: (0, 0)),     # support: fully VMEM-resident
        pl.BlockSpec((tm, f), lambda i, k: (i, 0)),    # per-node bias (bf16)
    ]
    operands = [adj, s, b]
    if not final:
        in_specs.append(pl.BlockSpec((f, fo), lambda i, k: (0, 0)))  # next-layer W
        operands.append(w_next)

    need = (2 * tm * tk * 2            # adj tiles (double-buffered bf16)
            + 2 * n * f * 2            # resident support
            + 2 * tm * f * 2           # bias tiles
            + (0 if final else 2 * f * fo * 2)
            + 2 * tm * fo * out_bytes  # output tiles
            + tm * f * 4)              # f32 accumulator scratch
    flops = 2 * n * n * f + (0 if final else 2 * n * f * fo)
    bytes_accessed = (n * n * 2 + n * f * 2 + n * f * 2
                      + (0 if final else f * fo * 2) + n * fo * out_bytes)

    return pl.pallas_call(
        kernel,
        out_shape=jax.ShapeDtypeStruct((n, fo), out_dtype),
        grid_spec=pltpu.PrefetchScalarGridSpec(
            num_scalar_prefetch=0,
            grid=(n // tm, n // tk),
            in_specs=in_specs,
            out_specs=pl.BlockSpec((tm, fo), lambda i, k: (i, 0)),
            scratch_shapes=[pltpu.VMEM((tm, f), jnp.float32)],
        ),
        compiler_params=pltpu.CompilerParams(
            dimension_semantics=(pltpu.PARALLEL, pltpu.ARBITRARY),
            vmem_limit_bytes=_vmem_limit(need, budget)),
        cost_estimate=pl.CostEstimate(
            flops=int(flops),
            transcendentals=int(n * fo) if final else 0,
            bytes_accessed=int(bytes_accessed)),
    )(*operands)


# ----------------------------- model forward --------------------------------
def gcn_forward(x, adj, params):
    """x: (N, F_in) f32, adj: (N, N) f32, params: [(W_i, b_i)] with
    W_i: (F_{i-1}, F_i), b_i: (N, F_i) (per-node bias, as in the PyTorch module)."""
    n, f_in = x.shape
    nclass = params[-1][0].shape[1]
    n_layers = len(params)

    dims = [f_in] + [w.shape[1] for w, _ in params]
    pdims = [_round_up(d, LANE) for d in dims]
    budget = _vmem_budget_bytes()

    # ---------------- fused, fully VMEM-resident path -----------------------
    n_pad_f = _round_up(max(n, 1), LANE)
    fused_need = (n_pad_f * n_pad_f * 2                                   # adj bf16
                  + n_pad_f * pdims[0] * 2                                # x bf16
                  + sum(pdims[i] * pdims[i + 1] * 2 for i in range(n_layers))
                  + sum(n_pad_f * pdims[i + 1] * 4 for i in range(n_layers))  # biases
                  + n_pad_f * pdims[-1] * 4                               # output
                  + 4 * n_pad_f * max(pdims) * 4)                         # live temps
    if fused_need <= 0.5 * budget:
        adj_bf = _pad2d(adj, n_pad_f, n_pad_f).astype(jnp.bfloat16)
        x_p = _pad2d(x, n_pad_f, pdims[0]).astype(jnp.bfloat16)
        operands = [adj_bf, x_p]
        for i, (w, b) in enumerate(params):
            operands.append(_pad2d(w, pdims[i], pdims[i + 1]).astype(jnp.bfloat16))
            operands.append(_pad2d(b, n_pad_f, pdims[i + 1]).astype(jnp.float32))
        flops = sum(2 * n_pad_f * pdims[i] * pdims[i + 1]
                    + 2 * n_pad_f * n_pad_f * pdims[i + 1]
                    for i in range(n_layers))
        io_bytes = sum(int(o.size) * o.dtype.itemsize for o in operands)
        out = pl.pallas_call(
            _fused_kernel,
            out_shape=jax.ShapeDtypeStruct((n_pad_f, pdims[-1]), jnp.float32),
            compiler_params=pltpu.CompilerParams(
                vmem_limit_bytes=_vmem_limit(fused_need, budget)),
            cost_estimate=pl.CostEstimate(
                flops=int(flops),
                transcendentals=int(n_pad_f * pdims[-1]),
                bytes_accessed=int(io_bytes + n_pad_f * pdims[-1] * 4)),
        )(*operands)
        return out[:n, :nclass]

    # ---------------- tiled path (large graphs) ------------------------------
    tm = _row_tile(n)
    n_pad = _round_up(n, tm)          # zero-pad N: padded rows/cols are inert
    tk = _k_tile(n_pad)

    adj_bf = _pad2d(adj, n_pad, n_pad).astype(jnp.bfloat16)
    x_p = _pad2d(x, n_pad, pdims[0]).astype(jnp.bfloat16)
    ws = [_pad2d(w, pdims[i], pdims[i + 1]).astype(jnp.bfloat16)
          for i, (w, _) in enumerate(params)]
    bs = [_pad2d(b, n_pad, pdims[i + 1]).astype(jnp.bfloat16)
          for i, (_, b) in enumerate(params)]

    # layer-1 support:  s_1 = x @ W_1
    s = _dense(x_p, ws[0], tm, budget)
    # layers 1..L-1:  s_{l+1} = relu(adj @ s_l + b_l) @ W_{l+1}   (fused epilogue)
    for l in range(n_layers - 1):
        s = _aggregate(adj_bf, s, bs[l], ws[l + 1], tm, tk, budget, final=False)
    # last layer:  sigmoid(adj @ s_L + b_L)
    out = _aggregate(adj_bf, s, bs[-1], None, tm, tk, budget, final=True)
    return out[:n, :nclass]


def init_gcn_params(key, total_nodes, in_feature, nclass=1):
    """Deterministic init matching GraphConvolution.reset_parameters (uniform +-1/sqrt(out))."""
    dims = [(in_feature, 64), (64, 128), (128, 64), (64, 32), (32, nclass)]
    params = []
    for (fi, fo) in dims:
        key, kw, kb = jax.random.split(key, 3)
        stdv = 1.0 / math.sqrt(fo)
        w = jax.random.uniform(kw, (fi, fo), jnp.float32, -stdv, stdv)
        b = jax.random.uniform(kb, (total_nodes, fo), jnp.float32, -stdv, stdv)
        params.append((w, b))
    return params


def gcn_reference(x, adj, params):
    h = x
    for i, (w, b) in enumerate(params):
        h = adj @ (h @ w) + b
        if i < len(params) - 1:
            h = jnp.maximum(h, 0.0)
    return jax.nn.sigmoid(h)


if __name__ == "__main__":
    # cfg: total_nodes=8, input_feature=16, nclass=1
    total_nodes, in_feature, nclass = 8, 16, 1

    key = jax.random.PRNGKey(0)
    key, kx, ka = jax.random.split(key, 3)
    x = jax.random.normal(kx, (total_nodes, in_feature), jnp.float32)
    # symmetric, row-normalized adjacency (deterministic)
    a = jax.random.uniform(ka, (total_nodes, total_nodes), jnp.float32)
    adj = (a + a.T) * 0.5 + jnp.eye(total_nodes, dtype=jnp.float32)
    adj = adj / jnp.sum(adj, axis=1, keepdims=True)

    params = init_gcn_params(key, total_nodes, in_feature, nclass)

    out = jax.jit(gcn_forward)(x, adj, params)
    out = jax.block_until_ready(out)

    ref = gcn_reference(x, adj, params)
    assert out.shape == (total_nodes, nclass)
    # bf16 matmul inputs (f32 accumulation) vs the f32 reference -> loose tolerance
    assert jnp.allclose(out, ref, atol=2e-2, rtol=2e-2), "mismatch vs JAX reference"
    print("KERNEL_OK")
</pallas_src>

<mosaic_0001>
module attributes {stable_mosaic.version = 11 : i64} {
  func.func @_fused_kernel(%arg0: memref<128x128xbf16, #tpu.memory_space<vmem>>, %arg1: memref<128x128xbf16, #tpu.memory_space<vmem>>, %arg2: memref<128x128xbf16, #tpu.memory_space<vmem>>, %arg3: memref<128x128xf32, #tpu.memory_space<vmem>>, %arg4: memref<128x128xbf16, #tpu.memory_space<vmem>>, %arg5: memref<128x128xf32, #tpu.memory_space<vmem>>, %arg6: memref<128x128xbf16, #tpu.memory_space<vmem>>, %arg7: memref<128x128xf32, #tpu.memory_space<vmem>>, %arg8: memref<128x128xbf16, #tpu.memory_space<vmem>>, %arg9: memref<128x128xf32, #tpu.memory_space<vmem>>, %arg10: memref<128x128xbf16, #tpu.memory_space<vmem>>, %arg11: memref<128x128xf32, #tpu.memory_space<vmem>>, %arg12: memref<128x128xf32, #tpu.memory_space<vmem>>) attributes {dimension_semantics = [], scalar_prefetch = 0 : i64, scratch_operands = 0 : i64, tpu.core_type = #tpu.core_type<tc>} {
    %c0 = arith.constant 0 : index
    %c0_0 = arith.constant 0 : index
    %0 = vector.load %arg0[%c0, %c0_0] : memref<128x128xbf16, #tpu.memory_space<vmem>>, vector<128x128xbf16>
    %c0_1 = arith.constant 0 : index
    %c0_2 = arith.constant 0 : index
    %1 = vector.load %arg1[%c0_1, %c0_2] : memref<128x128xbf16, #tpu.memory_space<vmem>>, vector<128x128xbf16>
    %c0_3 = arith.constant 0 : index
    %c0_4 = arith.constant 0 : index
    %2 = vector.load %arg2[%c0_3, %c0_4] : memref<128x128xbf16, #tpu.memory_space<vmem>>, vector<128x128xbf16>
    %c0_5 = arith.constant 0 : index
    %c0_6 = arith.constant 0 : index
    %3 = vector.load %arg3[%c0_5, %c0_6] : memref<128x128xf32, #tpu.memory_space<vmem>>, vector<128x128xf32>
    %cst = arith.constant dense<0.000000e+00> : vector<128x128xf32>
    %4 = tpu.matmul %1, %2, %cst {dimension_numbers = #tpu.dot_dimension_numbers<[1], [0], [0], [1], [0, 0, 1, 1], [], []>} : vector<128x128xbf16>, vector<128x128xbf16>, vector<128x128xf32> -> vector<128x128xf32>
    %5 = arith.truncf %4 : vector<128x128xf32> to vector<128x128xbf16>
    %cst_7 = arith.constant dense<0.000000e+00> : vector<128x128xf32>
    %6 = tpu.matmul %0, %5, %cst_7 {dimension_numbers = #tpu.dot_dimension_numbers<[1], [0], [0], [1], [0, 0, 1, 1], [], []>} : vector<128x128xbf16>, vector<128x128xbf16>, vector<128x128xf32> -> vector<128x128xf32>
    %7 = arith.addf %6, %3 : vector<128x128xf32>
    %cst_8 = arith.constant 0.000000e+00 : f32
    %8 = vector.broadcast %cst_8 : f32 to vector<128x128xf32>
    %9 = arith.maximumf %7, %8 : vector<128x128xf32>
    %10 = arith.truncf %9 : vector<128x128xf32> to vector<128x128xbf16>
    %c0_9 = arith.constant 0 : index
    %c0_10 = arith.constant 0 : index
    %11 = vector.load %arg4[%c0_9, %c0_10] : memref<128x128xbf16, #tpu.memory_space<vmem>>, vector<128x128xbf16>
    %c0_11 = arith.constant 0 : index
    %c0_12 = arith.constant 0 : index
    %12 = vector.load %arg5[%c0_11, %c0_12] : memref<128x128xf32, #tpu.memory_space<vmem>>, vector<128x128xf32>
    %cst_13 = arith.constant dense<0.000000e+00> : vector<128x128xf32>
    %13 = tpu.matmul %10, %11, %cst_13 {dimension_numbers = #tpu.dot_dimension_numbers<[1], [0], [0], [1], [0, 0, 1, 1], [], []>} : vector<128x128xbf16>, vector<128x128xbf16>, vector<128x128xf32> -> vector<128x128xf32>
    %14 = arith.truncf %13 : vector<128x128xf32> to vector<128x128xbf16>
    %cst_14 = arith.constant dense<0.000000e+00> : vector<128x128xf32>
    %15 = tpu.matmul %0, %14, %cst_14 {dimension_numbers = #tpu.dot_dimension_numbers<[1], [0], [0], [1], [0, 0, 1, 1], [], []>} : vector<128x128xbf16>, vector<128x128xbf16>, vector<128x128xf32> -> vector<128x128xf32>
    %16 = arith.addf %15, %12 : vector<128x128xf32>
    %cst_15 = arith.constant 0.000000e+00 : f32
    %17 = vector.broadcast %cst_15 : f32 to vector<128x128xf32>
    %18 = arith.maximumf %16, %17 : vector<128x128xf32>
    %19 = arith.truncf %18 : vector<128x128xf32> to vector<128x128xbf16>
    %c0_16 = arith.constant 0 : index
    %c0_17 = arith.constant 0 : index
    %20 = vector.load %arg6[%c0_16, %c0_17] : memref<128x128xbf16, #tpu.memory_space<vmem>>, vector<128x128xbf16>
    %c0_18 = arith.constant 0 : index
    %c0_19 = arith.constant 0 : index
    %21 = vector.load %arg7[%c0_18, %c0_19] : memref<128x128xf32, #tpu.memory_space<vmem>>, vector<128x128xf32>
    %cst_20 = arith.constant dense<0.000000e+00> : vector<128x128xf32>
    %22 = tpu.matmul %19, %20, %cst_20 {dimension_numbers = #tpu.dot_dimension_numbers<[1], [0], [0], [1], [0, 0, 1, 1], [], []>} : vector<128x128xbf16>, vector<128x128xbf16>, vector<128x128xf32> -> vector<128x128xf32>
    %23 = arith.truncf %22 : vector<128x128xf32> to vector<128x128xbf16>
    %cst_21 = arith.constant dense<0.000000e+00> : vector<128x128xf32>
    %24 = tpu.matmul %0, %23, %cst_21 {dimension_numbers = #tpu.dot_dimension_numbers<[1], [0], [0], [1], [0, 0, 1, 1], [], []>} : vector<128x128xbf16>, vector<128x128xbf16>, vector<128x128xf32> -> vector<128x128xf32>
    %25 = arith.addf %24, %21 : vector<128x128xf32>
    %cst_22 = arith.constant 0.000000e+00 : f32
    %26 = vector.broadcast %cst_22 : f32 to vector<128x128xf32>
    %27 = arith.maximumf %25, %26 : vector<128x128xf32>
    %28 = arith.truncf %27 : vector<128x128xf32> to vector<128x128xbf16>
    %c0_23 = arith.constant 0 : index
    %c0_24 = arith.constant 0 : index
    %29 = vector.load %arg8[%c0_23, %c0_24] : memref<128x128xbf16, #tpu.memory_space<vmem>>, vector<128x128xbf16>
    %c0_25 = arith.constant 0 : index
    %c0_26 = arith.constant 0 : index
    %30 = vector.load %arg9[%c0_25, %c0_26] : memref<128x128xf32, #tpu.memory_space<vmem>>, vector<128x128xf32>
    %cst_27 = arith.constant dense<0.000000e+00> : vector<128x128xf32>
    %31 = tpu.matmul %28, %29, %cst_27 {dimension_numbers = #tpu.dot_dimension_numbers<[1], [0], [0], [1], [0, 0, 1, 1], [], []>} : vector<128x128xbf16>, vector<128x128xbf16>, vector<128x128xf32> -> vector<128x128xf32>
    %32 = arith.truncf %31 : vector<128x128xf32> to vector<128x128xbf16>
    %cst_28 = arith.constant dense<0.000000e+00> : vector<128x128xf32>
    %33 = tpu.matmul %0, %32, %cst_28 {dimension_numbers = #tpu.dot_dimension_numbers<[1], [0], [0], [1], [0, 0, 1, 1], [], []>} : vector<128x128xbf16>, vector<128x128xbf16>, vector<128x128xf32> -> vector<128x128xf32>
    %34 = arith.addf %33, %30 : vector<128x128xf32>
    %cst_29 = arith.constant 0.000000e+00 : f32
    %35 = vector.broadcast %cst_29 : f32 to vector<128x128xf32>
    %36 = arith.maximumf %34, %35 : vector<128x128xf32>
    %37 = arith.truncf %36 : vector<128x128xf32> to vector<128x128xbf16>
    %c0_30 = arith.constant 0 : index
    %c0_31 = arith.constant 0 : index
    %38 = vector.load %arg10[%c0_30, %c0_31] : memref<128x128xbf16, #tpu.memory_space<vmem>>, vector<128x128xbf16>
    %c0_32 = arith.constant 0 : index
    %c0_33 = arith.constant 0 : index
    %39 = vector.load %arg11[%c0_32, %c0_33] : memref<128x128xf32, #tpu.memory_space<vmem>>, vector<128x128xf32>
    %cst_34 = arith.constant dense<0.000000e+00> : vector<128x128xf32>
    %40 = tpu.matmul %37, %38, %cst_34 {dimension_numbers = #tpu.dot_dimension_numbers<[1], [0], [0], [1], [0, 0, 1, 1], [], []>} : vector<128x128xbf16>, vector<128x128xbf16>, vector<128x128xf32> -> vector<128x128xf32>
    %41 = arith.truncf %40 : vector<128x128xf32> to vector<128x128xbf16>
    %cst_35 = arith.constant dense<0.000000e+00> : vector<128x128xf32>
    %42 = tpu.matmul %0, %41, %cst_35 {dimension_numbers = #tpu.dot_dimension_numbers<[1], [0], [0], [1], [0, 0, 1, 1], [], []>} : vector<128x128xbf16>, vector<128x128xbf16>, vector<128x128xf32> -> vector<128x128xf32>
    %43 = arith.addf %42, %39 : vector<128x128xf32>
    %cst_36 = arith.constant 0.000000e+00 : f32
    %44 = vector.broadcast %cst_36 : f32 to vector<128x128xf32>
    %45 = arith.subf %44, %43 : vector<128x128xf32>
    %46 = math.exp %45 : vector<128x128xf32>
    %cst_37 = arith.constant 1.000000e+00 : f32
    %47 = vector.broadcast %cst_37 : f32 to vector<128x128xf32>
    %48 = arith.addf %47, %46 : vector<128x128xf32>
    %cst_38 = arith.constant 1.000000e+00 : f32
    %49 = vector.broadcast %cst_38 : f32 to vector<128x128xf32>
    %50 = arith.divf %49, %48 : vector<128x128xf32>
    %c0_39 = arith.constant 0 : index
    %c0_40 = arith.constant 0 : index
    %51 = vector.load %arg12[%c0_39, %c0_40] : memref<128x128xf32, #tpu.memory_space<vmem>>, vector<128x128xf32>
    tpu.vector_store %arg12[%c0_39, %c0_40], %50 {strides = array<i32>} : memref<128x128xf32, #tpu.memory_space<vmem>>, vector<128x128xf32>,
    return
  }
}

</mosaic_0001>

<llo_original>
// kernel: gcn_forward.1
$region0: #{gcn_forward.1}
  #allocation0 [shape = 'u32[]', space=smem, size = 0x4, offset = 0x4, fixed_abs, tag = 'smem constant byte address 0x4 - core index']
  #allocation1 [shape = 'u32[144,128]{1,0:T(1,128)}', space=vmem, size = 0x12000, scoped, tag = 'internal scratch']
  %s0 = inlined_call_operand.vmem [shape: bf16[128,128], index: 0, kind: input, shape index: {}]
  %s1 = inlined_call_operand.vmem [shape: bf16[128,128], index: 1, kind: input, shape index: {}]
  %s2 = inlined_call_operand.vmem [shape: bf16[128,128], index: 2, kind: input, shape index: {}]
  %s3 = inlined_call_operand.vmem [shape: f32[128,128], index: 3, kind: input, shape index: {}]
  %s4 = inlined_call_operand.vmem [shape: bf16[128,128], index: 4, kind: input, shape index: {}]
  %s5 = inlined_call_operand.vmem [shape: f32[128,128], index: 5, kind: input, shape index: {}]
  %s6 = inlined_call_operand.vmem [shape: bf16[128,128], index: 6, kind: input, shape index: {}]
  %s7 = inlined_call_operand.vmem [shape: f32[128,128], index: 7, kind: input, shape index: {}]
  %s8 = inlined_call_operand.vmem [shape: bf16[128,128], index: 8, kind: input, shape index: {}]
  %s9 = inlined_call_operand.vmem [shape: f32[128,128], index: 9, kind: input, shape index: {}]
  %s10 = inlined_call_operand.vmem [shape: bf16[128,128], index: 10, kind: input, shape index: {}]
  %s11 = inlined_call_operand.vmem [shape: f32[128,128], index: 11, kind: input, shape index: {}]
  %s12 = inlined_call_operand.vmem [shape: f32[128,128], index: 12, kind: output, shape index: {}]
  %s13 = sld [smem:[#allocation0]]
  $region58: #{gcn_forward.1} parent=0
    _
  %s15 = ssub.s32 1, %s13
  %s16 = scalar_select 0, %s15, %s13
  // Predicated region
  $region2: #{gcn_forward.1} parent=0 // pred_check
    _
  $region3: #{gcn_forward.1} parent=0 // pred_check_branch
    %18 = sbr.rel (0) target = $region5
  $region4: #{gcn_forward.1} parent=0 // pred_region
    _
  $region5: #{gcn_forward.1} parent=0 // pred_fallthru
    _
  // Predicated region
  $region6: #{gcn_forward.1} parent=0 // pred_check
    _
  $region7: #{gcn_forward.1} parent=0 // pred_check_branch
    %20 = sbr.rel (0) target = $region9
  $region8: #{gcn_forward.1} parent=0 // pred_region
    _
  $region9: #{gcn_forward.1} parent=0 // pred_fallthru
    _
  // Predicated region
  $region10: #{gcn_forward.1} parent=0 // pred_check
    _
  $region11: #{gcn_forward.1} parent=0 // pred_check_branch
    %22 = sbr.rel (0) target = $region13
  $region12: #{gcn_forward.1} parent=0 // pred_region
    _
  $region13: #{gcn_forward.1} parent=0 // pred_fallthru
    _
  // Predicated region
  $region14: #{gcn_forward.1} parent=0 // pred_check
    _
  $region15: #{gcn_forward.1} parent=0 // pred_check_branch
    %24 = sbr.rel (0) target = $region17
  $region16: #{gcn_forward.1} parent=0 // pred_region
    _
  $region17: #{gcn_forward.1} parent=0 // pred_fallthru
    _
  // Predicated region
  $region18: #{gcn_forward.1} parent=0 // pred_check
    _
  $region19: #{gcn_forward.1} parent=0 // pred_check_branch
    %26 = sbr.rel (0) target = $region21
  $region20: #{gcn_forward.1} parent=0 // pred_region
    _
  $region21: #{gcn_forward.1} parent=0 // pred_fallthru
    _
  // Predicated region
  $region22: #{gcn_forward.1} parent=0 // pred_check
    _
  $region23: #{gcn_forward.1} parent=0 // pred_check_branch
    %28 = sbr.rel (0) target = $region25
  $region24: #{gcn_forward.1} parent=0 // pred_region
    _
  $region25: #{gcn_forward.1} parent=0 // pred_fallthru
    _
  // Predicated region
  $region26: #{gcn_forward.1} parent=0 // pred_check
    _
  $region27: #{gcn_forward.1} parent=0 // pred_check_branch
    %30 = sbr.rel (0) target = $region29
  $region28: #{gcn_forward.1} parent=0 // pred_region
    _
  $region29: #{gcn_forward.1} parent=0 // pred_fallthru
    _
  // Predicated region
  $region30: #{gcn_forward.1} parent=0 // pred_check
    _
  $region31: #{gcn_forward.1} parent=0 // pred_check_branch
    %32 = sbr.rel (0) target = $region33
  $region32: #{gcn_forward.1} parent=0 // pred_region
    _
  $region33: #{gcn_forward.1} parent=0 // pred_fallthru
    _
  // Predicated region
  $region34: #{gcn_forward.1} parent=0 // pred_check
    _
  $region35: #{gcn_forward.1} parent=0 // pred_check_branch
    %34 = sbr.rel (0) target = $region37
  $region36: #{gcn_forward.1} parent=0 // pred_region
    _
  $region37: #{gcn_forward.1} parent=0 // pred_fallthru
    _
  // Predicated region
  $region38: #{gcn_forward.1} parent=0 // pred_check
    _
  $region39: #{gcn_forward.1} parent=0 // pred_check_branch
    %36 = sbr.rel (0) target = $region41
  $region40: #{gcn_forward.1} parent=0 // pred_region
    _
  $region41: #{gcn_forward.1} parent=0 // pred_fallthru
    _
  // Predicated region
  $region42: #{gcn_forward.1} parent=0 // pred_check
    _
  $region43: #{gcn_forward.1} parent=0 // pred_check_branch
    %38 = sbr.rel (0) target = $region45
  $region44: #{gcn_forward.1} parent=0 // pred_region
    _
  $region45: #{gcn_forward.1} parent=0 // pred_fallthru
    _
  // Predicated region
  $region46: #{gcn_forward.1} parent=0 // pred_check
    _
  $region47: #{gcn_forward.1} parent=0 // pred_check_branch
    %40 = sbr.rel (0) target = $region49
  $region48: #{gcn_forward.1} parent=0 // pred_region
    _
  $region49: #{gcn_forward.1} parent=0 // pred_fallthru
    _
  %v42 = vld [vmem:[%s0] sm:$0xf]
  %v43 = vld [vmem:[%s0 + $0x4] sm:$0xf]
  %v44 = vld [vmem:[%s0 + $0x8] sm:$0xf]
  %v45 = vld [vmem:[%s0 + $0xc] sm:$0xf]
  %v46 = vld [vmem:[%s0 + $0x10] sm:$0xf]
  %v47 = vld [vmem:[%s0 + $0x14] sm:$0xf]
  %v48 = vld [vmem:[%s0 + $0x18] sm:$0xf]
  %v49 = vld [vmem:[%s0 + $0x1c] sm:$0xf]
  %v50 = vld [vmem:[%s0 + $0x20] sm:$0xf]
  %v51 = vld [vmem:[%s0 + $0x24] sm:$0xf]
  %v52 = vld [vmem:[%s0 + $0x28] sm:$0xf]
  %v53 = vld [vmem:[%s0 + $0x2c] sm:$0xf]
  %v54 = vld [vmem:[%s0 + $0x30] sm:$0xf]
  %v55 = vld [vmem:[%s0 + $0x34] sm:$0xf]
  %v56 = vld [vmem:[%s0 + $0x38] sm:$0xf]
  %v57 = vld [vmem:[%s0 + $0x3c] sm:$0xf]
  %v58 = vld [vmem:[%s1] sm:$0xf]
  %v59 = vld [vmem:[%s1 + $0x4] sm:$0xf]
  %v60 = vld [vmem:[%s1 + $0x8] sm:$0xf]
  %v61 = vld [vmem:[%s1 + $0xc] sm:$0xf]
  %v62 = vld [vmem:[%s1 + $0x10] sm:$0xf]
  %v63 = vld [vmem:[%s1 + $0x14] sm:$0xf]
  %v64 = vld [vmem:[%s1 + $0x18] sm:$0xf]
  %v65 = vld [vmem:[%s1 + $0x1c] sm:$0xf]
  %v66 = vld [vmem:[%s1 + $0x20] sm:$0xf]
  %v67 = vld [vmem:[%s1 + $0x24] sm:$0xf]
  %v68 = vld [vmem:[%s1 + $0x28] sm:$0xf]
  %v69 = vld [vmem:[%s1 + $0x2c] sm:$0xf]
  %v70 = vld [vmem:[%s1 + $0x30] sm:$0xf]
  %v71 = vld [vmem:[%s1 + $0x34] sm:$0xf]
  %v72 = vld [vmem:[%s1 + $0x38] sm:$0xf]
  %v73 = vld [vmem:[%s1 + $0x3c] sm:$0xf]
  %v74 = vld [vmem:[%s2] sm:$0xf]
  %v75 = vld [vmem:[%s2 + $0x4] sm:$0xf]
  %v76 = vld [vmem:[%s2 + $0x8] sm:$0xf]
  %v77 = vld [vmem:[%s2 + $0xc] sm:$0xf]
  %v78 = vld [vmem:[%s2 + $0x10] sm:$0xf]
  %v79 = vld [vmem:[%s2 + $0x14] sm:$0xf]
  %v80 = vld [vmem:[%s2 + $0x18] sm:$0xf]
  %v81 = vld [vmem:[%s2 + $0x1c] sm:$0xf]
  %v82 = vld [vmem:[%s2 + $0x20] sm:$0xf]
  %v83 = vld [vmem:[%s2 + $0x24] sm:$0xf]
  %v84 = vld [vmem:[%s2 + $0x28] sm:$0xf]
  %v85 = vld [vmem:[%s2 + $0x2c] sm:$0xf]
  %v86 = vld [vmem:[%s2 + $0x30] sm:$0xf]
  %v87 = vld [vmem:[%s2 + $0x34] sm:$0xf]
  %v88 = vld [vmem:[%s2 + $0x38] sm:$0xf]
  %v89 = vld [vmem:[%s2 + $0x3c] sm:$0xf]
  %v90 = vld [vmem:[%s3] sm:$0xff]
  %v91 = vld [vmem:[%s3 + $0x8] sm:$0xff]
  %v92 = vld [vmem:[%s3 + $0x10] sm:$0xff]
  %v93 = vld [vmem:[%s3 + $0x18] sm:$0xff]
  %v94 = vld [vmem:[%s3 + $0x20] sm:$0xff]
  %v95 = vld [vmem:[%s3 + $0x28] sm:$0xff]
  %v96 = vld [vmem:[%s3 + $0x30] sm:$0xff]
  %v97 = vld [vmem:[%s3 + $0x38] sm:$0xff]
  %v98 = vld [vmem:[%s3 + $0x40] sm:$0xff]
  %v99 = vld [vmem:[%s3 + $0x48] sm:$0xff]
  %v100 = vld [vmem:[%s3 + $0x50] sm:$0xff]
  %v101 = vld [vmem:[%s3 + $0x58] sm:$0xff]
  %v102 = vld [vmem:[%s3 + $0x60] sm:$0xff]
  %v103 = vld [vmem:[%s3 + $0x68] sm:$0xff]
  %v104 = vld [vmem:[%s3 + $0x70] sm:$0xff]
  %v105 = vld [vmem:[%s3 + $0x78] sm:$0xff]
  %v122 = vunpack.c.l.b16 %v58
  %v123 = vunpack.c.l.b16 %v59
  %v124 = vunpack.c.l.b16 %v60
  %v125 = vunpack.c.l.b16 %v61
  %v126 = vunpack.c.l.b16 %v62
  %v127 = vunpack.c.l.b16 %v63
  %v128 = vunpack.c.l.b16 %v64
  %v129 = vunpack.c.l.b16 %v65
  %v130 = vunpack.c.l.b16 %v66
  %v131 = vunpack.c.l.b16 %v67
  %v132 = vunpack.c.l.b16 %v68
  %v133 = vunpack.c.l.b16 %v69
  %v134 = vunpack.c.l.b16 %v70
  %v135 = vunpack.c.l.b16 %v71
  %v136 = vunpack.c.l.b16 %v72
  %v137 = vunpack.c.l.b16 %v73
  %v138 = vpack.c.b16 %v123, %v122
  %v139 = vpack.c.b16 %v125, %v124
  %v140 = vpack.c.b16 %v127, %v126
  %v141 = vpack.c.b16 %v129, %v128
  %v142 = vpack.c.b16 %v131, %v130
  %v143 = vpack.c.b16 %v133, %v132
  %v144 = vpack.c.b16 %v135, %v134
  %v145 = vpack.c.b16 %v137, %v136
  %v170 = vunpack.c.l.b16 %v74
  %v171 = vunpack.c.l.b16 %v75
  %v172 = vunpack.c.l.b16 %v76
  %v173 = vunpack.c.l.b16 %v77
  %v174 = vunpack.c.l.b16 %v78
  %v175 = vunpack.c.l.b16 %v79
  %v176 = vunpack.c.l.b16 %v80
  %v177 = vunpack.c.l.b16 %v81
  %v178 = vunpack.c.l.b16 %v82
  %v179 = vunpack.c.l.b16 %v83
  %v180 = vunpack.c.l.b16 %v84
  %v181 = vunpack.c.l.b16 %v85
  %v182 = vunpack.c.l.b16 %v86
  %v183 = vunpack.c.l.b16 %v87
  %v184 = vunpack.c.l.b16 %v88
  %v185 = vunpack.c.l.b16 %v89
  %v186 = vpack.c.b16 %v171, %v170
  %v187 = vpack.c.b16 %v173, %v172
  %v188 = vpack.c.b16 %v175, %v174
  %v189 = vpack.c.b16 %v177, %v176
  %v190 = vpack.c.b16 %v179, %v178
  %v191 = vpack.c.b16 %v181, %v180
  %v192 = vpack.c.b16 %v183, %v182
  %v193 = vpack.c.b16 %v185, %v184
  %202 = vmatprep.subr.bf16.mxu0 0
  %203 = vmatpush1.bf16.msra.mxu0 %v186
  %204 = vmatprep.subr.bf16.mxu0 0
  %205 = vmatpush1.bf16.msra.mxu0 %v187
  %206 = vmatprep.subr.bf16.mxu0 0
  %207 = vmatpush1.bf16.msra.mxu0 %v188
  %208 = vmatprep.subr.bf16.mxu0 0
  %209 = vmatpush1.bf16.msra.mxu0 %v189
  %210 = vmatprep.subr.bf16.mxu0 0
  %211 = vmatpush1.bf16.msra.mxu0 %v190
  %212 = vmatprep.subr.bf16.mxu0 0
  %213 = vmatpush1.bf16.msra.mxu0 %v191
  %214 = vmatprep.subr.bf16.mxu0 0
  %215 = vmatpush1.bf16.msra.mxu0 %v192
  %216 = vmatprep.subr.bf16.mxu0 0
  %217 = vmatpush1.bf16.msra.mxu0 %v193
  %218 = vmatprep.subr.bf16.mxu0 0
  %219 = vmatpush1.bf16.msra.mxu0 0
  %220 = vmatprep.subr.bf16.mxu0 0
  %221 = vmatpush1.bf16.msra.mxu0 0
  %222 = vmatprep.subr.bf16.mxu0 0
  %223 = vmatpush1.bf16.msra.mxu0 0
  %224 = vmatprep.subr.bf16.mxu0 0
  %225 = vmatpush1.bf16.msra.mxu0 0
  %226 = vmatprep.subr.bf16.mxu0 0
  %227 = vmatpush1.bf16.msra.mxu0 0
  %228 = vmatprep.subr.bf16.mxu0 0
  %229 = vmatpush1.bf16.msra.mxu0 0
  %230 = vmatprep.subr.bf16.mxu0 0
  %231 = vmatpush1.bf16.msra.mxu0 0
  %232 = vmatprep.subr.bf16.mxu0 0
  %233 = vmatpush1.bf16.msra.mxu0 0
  %234 = vmatprep.mubr.bf16.mxu0 0
  %235 = vmatmul.mubr.bf16.gmra.mrb[0].mxu0 %v138
  %v236 = vpop.f32.mrb[0].mxu0
  %v237 = vadd.f32 0.0, %v236
  %v238 = vpop.f32.mrb[0].mxu0
  %v239 = vpop.f32.mrb[0].mxu0
  %v240 = vadd.f32 0.0, %v239
  %v241 = vpop.f32.mrb[0].mxu0
  %242 = vmatprep.mubr.bf16.mxu0 0
  %243 = vmatmul.mubr.bf16.gmra.mrb[0].mxu0 %v139
  %v244 = vpop.f32.mrb[0].mxu0
  %v245 = vadd.f32 0.0, %v244
  %v246 = vpop.f32.mrb[0].mxu0
  %v247 = vpop.f32.mrb[0].mxu0
  %v248 = vadd.f32 0.0, %v247
  %v249 = vpop.f32.mrb[0].mxu0
  %250 = vmatprep.mubr.bf16.mxu0 0
  %251 = vmatmul.mubr.bf16.gmra.mrb[0].mxu0 %v140
  %v252 = vpop.f32.mrb[0].mxu0
  %v253 = vadd.f32 0.0, %v252
  %v254 = vpop.f32.mrb[0].mxu0
  %v255 = vpop.f32.mrb[0].mxu0
  %v256 = vadd.f32 0.0, %v255
  %v257 = vpop.f32.mrb[0].mxu0
  %258 = vmatprep.mubr.bf16.mxu0 0
  %259 = vmatmul.mubr.bf16.gmra.mrb[0].mxu0 %v141
  %v260 = vpop.f32.mrb[0].mxu0
  %v261 = vadd.f32 0.0, %v260
  %v262 = vpop.f32.mrb[0].mxu0
  %v263 = vpop.f32.mrb[0].mxu0
  %v264 = vadd.f32 0.0, %v263
  %v265 = vpop.f32.mrb[0].mxu0
  %266 = vmatprep.mubr.bf16.mxu0 0
  %267 = vmatmul.mubr.bf16.gmra.mrb[0].mxu0 %v142
  %v268 = vpop.f32.mrb[0].mxu0
  %v269 = vadd.f32 0.0, %v268
  %v270 = vpop.f32.mrb[0].mxu0
  %v271 = vpop.f32.mrb[0].mxu0
  %v272 = vadd.f32 0.0, %v271
  %v273 = vpop.f32.mrb[0].mxu0
  %274 = vmatprep.mubr.bf16.mxu0 0
  %275 = vmatmul.mubr.bf16.gmra.mrb[0].mxu0 %v143
  %v276 = vpop.f32.mrb[0].mxu0
  %v277 = vadd.f32 0.0, %v276
  %v278 = vpop.f32.mrb[0].mxu0
  %v279 = vpop.f32.mrb[0].mxu0
  %v280 = vadd.f32 0.0, %v279
  %v281 = vpop.f32.mrb[0].mxu0
  %282 = vmatprep.mubr.bf16.mxu0 0
  %283 = vmatmul.mubr.bf16.gmra.mrb[0].mxu0 %v144
  %v284 = vpop.f32.mrb[0].mxu0
  %v285 = vadd.f32 0.0, %v284
  %v286 = vpop.f32.mrb[0].mxu0
  %v287 = vpop.f32.mrb[0].mxu0
  %v288 = vadd.f32 0.0, %v287
  %v289 = vpop.f32.mrb[0].mxu0
  %290 = vmatprep.mubr.bf16.mxu0 0
  %291 = vmatmul.mubr.bf16.gmra.mrb[0].mxu0 %v145
  %v292 = vpop.f32.mrb[0].mxu0
  %v293 = vadd.f32 0.0, %v292
  %v294 = vpop.f32.mrb[0].mxu0
  %v295 = vpop.f32.mrb[0].mxu0
  %v296 = vadd.f32 0.0, %v295
  %v297 = vpop.f32.mrb[0].mxu0
  %298 = vdwg.mxu0
  %v299 = vpack.c.bf16 %v240, %v237
  %v300 = vpack.c.bf16 %v248, %v245
  %v301 = vpack.c.bf16 %v256, %v253
  %v302 = vpack.c.bf16 %v264, %v261
  %v303 = vpack.c.bf16 %v272, %v269
  %v304 = vpack.c.bf16 %v280, %v277
  %v305 = vpack.c.bf16 %v288, %v285
  %v306 = vpack.c.bf16 %v296, %v293
  %v323 = vunpack.c.l.b16 %v42
  %v324 = vunpack.c.l.b16 %v43
  %v325 = vunpack.c.l.b16 %v44
  %v326 = vunpack.c.l.b16 %v45
  %v327 = vunpack.c.l.b16 %v46
  %v328 = vunpack.c.l.b16 %v47
  %v329 = vunpack.c.l.b16 %v48
  %v330 = vunpack.c.l.b16 %v49
  %v331 = vunpack.c.l.b16 %v50
  %v332 = vunpack.c.l.b16 %v51
  %v333 = vunpack.c.l.b16 %v52
  %v334 = vunpack.c.l.b16 %v53
  %v335 = vunpack.c.l.b16 %v54
  %v336 = vunpack.c.l.b16 %v55
  %v337 = vunpack.c.l.b16 %v56
  %v338 = vunpack.c.l.b16 %v57
  %v339 = vpack.c.b16 %v324, %v323
  %v340 = vpack.c.b16 %v326, %v325
  %v341 = vpack.c.b16 %v328, %v327
  %v342 = vpack.c.b16 %v330, %v329
  %v343 = vpack.c.b16 %v332, %v331
  %v344 = vpack.c.b16 %v334, %v333
  %v345 = vpack.c.b16 %v336, %v335
  %v346 = vpack.c.b16 %v338, %v337
  %355 = vmatprep.subr.bf16.mxu0 0
  %356 = vmatpush1.bf16.msra.mxu0 %v299
  %357 = vmatprep.subr.bf16.mxu0 0
  %358 = vmatpush1.bf16.msra.mxu0 %v300
  %359 = vmatprep.subr.bf16.mxu0 0
  %360 = vmatpush1.bf16.msra.mxu0 %v301
  %361 = vmatprep.subr.bf16.mxu0 0
  %362 = vmatpush1.bf16.msra.mxu0 %v302
  %363 = vmatprep.subr.bf16.mxu0 0
  %364 = vmatpush1.bf16.msra.mxu0 %v303
  %365 = vmatprep.subr.bf16.mxu0 0
  %366 = vmatpush1.bf16.msra.mxu0 %v304
  %367 = vmatprep.subr.bf16.mxu0 0
  %368 = vmatpush1.bf16.msra.mxu0 %v305
  %369 = vmatprep.subr.bf16.mxu0 0
  %370 = vmatpush1.bf16.msra.mxu0 %v306
  %371 = vmatprep.subr.bf16.mxu0 0
  %372 = vmatpush1.bf16.msra.mxu0 0
  %373 = vmatprep.subr.bf16.mxu0 0
  %374 = vmatpush1.bf16.msra.mxu0 0
  %375 = vmatprep.subr.bf16.mxu0 0
  %376 = vmatpush1.bf16.msra.mxu0 0
  %377 = vmatprep.subr.bf16.mxu0 0
  %378 = vmatpush1.bf16.msra.mxu0 0
  %379 = vmatprep.subr.bf16.mxu0 0
  %380 = vmatpush1.bf16.msra.mxu0 0
  %381 = vmatprep.subr.bf16.mxu0 0
  %382 = vmatpush1.bf16.msra.mxu0 0
  %383 = vmatprep.subr.bf16.mxu0 0
  %384 = vmatpush1.bf16.msra.mxu0 0
  %385 = vmatprep.subr.bf16.mxu0 0
  %386 = vmatpush1.bf16.msra.mxu0 0
  %387 = vmatprep.mubr.bf16.mxu0 0
  %388 = vmatmul.mubr.bf16.gmra.mrb[0].mxu0 %v339
  %v389 = vpop.f32.mrb[0].mxu0
  %v390 = vadd.f32 %v90, %v389
  %v391 = vpop.f32.mrb[0].mxu0
  %v392 = vpop.f32.mrb[0].mxu0
  %v393 = vadd.f32 %v91, %v392
  %v394 = vpop.f32.mrb[0].mxu0
  %395 = vmatprep.mubr.bf16.mxu0 0
  %396 = vmatmul.mubr.bf16.gmra.mrb[0].mxu0 %v340
  %v397 = vpop.f32.mrb[0].mxu0
  %v398 = vadd.f32 %v92, %v397
  %v399 = vpop.f32.mrb[0].mxu0
  %v400 = vpop.f32.mrb[0].mxu0
  %v401 = vadd.f32 %v93, %v400
  %v402 = vpop.f32.mrb[0].mxu0
  %403 = vmatprep.mubr.bf16.mxu0 0
  %404 = vmatmul.mubr.bf16.gmra.mrb[0].mxu0 %v341
  %v405 = vpop.f32.mrb[0].mxu0
  %v406 = vadd.f32 %v94, %v405
  %v407 = vpop.f32.mrb[0].mxu0
  %v408 = vpop.f32.mrb[0].mxu0
  %v409 = vadd.f32 %v95, %v408
  %v410 = vpop.f32.mrb[0].mxu0
  %411 = vmatprep.mubr.bf16.mxu0 0
  %412 = vmatmul.mubr.bf16.gmra.mrb[0].mxu0 %v342
  %v413 = vpop.f32.mrb[0].mxu0
  %v414 = vadd.f32 %v96, %v413
  %v415 = vpop.f32.mrb[0].mxu0
  %v416 = vpop.f32.mrb[0].mxu0
  %v417 = vadd.f32 %v97, %v416
  %v418 = vpop.f32.mrb[0].mxu0
  %419 = vmatprep.mubr.bf16.mxu0 0
  %420 = vmatmul.mubr.bf16.gmra.mrb[0].mxu0 %v343
  %v421 = vpop.f32.mrb[0].mxu0
  %v422 = vadd.f32 %v98, %v421
  %v423 = vpop.f32.mrb[0].mxu0
  %v424 = vpop.f32.mrb[0].mxu0
  %v425 = vadd.f32 %v99, %v424
  %v426 = vpop.f32.mrb[0].mxu0
  %427 = vmatprep.mubr.bf16.mxu0 0
  %428 = vmatmul.mubr.bf16.gmra.mrb[0].mxu0 %v344
  %v429 = vpop.f32.mrb[0].mxu0
  %v430 = vadd.f32 %v100, %v429
  %v431 = vpop.f32.mrb[0].mxu0
  %v432 = vpop.f32.mrb[0].mxu0
  %v433 = vadd.f32 %v101, %v432
  %v434 = vpop.f32.mrb[0].mxu0
  %435 = vmatprep.mubr.bf16.mxu0 0
  %436 = vmatmul.mubr.bf16.gmra.mrb[0].mxu0 %v345
  %v437 = vpop.f32.mrb[0].mxu0
  %v438 = vadd.f32 %v102, %v437
  %v439 = vpop.f32.mrb[0].mxu0
  %v440 = vpop.f32.mrb[0].mxu0
  %v441 = vadd.f32 %v103, %v440
  %v442 = vpop.f32.mrb[0].mxu0
  %443 = vmatprep.mubr.bf16.mxu0 0
  %444 = vmatmul.mubr.bf16.gmra.mrb[0].mxu0 %v346
  %v445 = vpop.f32.mrb[0].mxu0
  %v446 = vadd.f32 %v104, %v445
  %v447 = vpop.f32.mrb[0].mxu0
  %v448 = vpop.f32.mrb[0].mxu0
  %v449 = vadd.f32 %v105, %v448
  %v450 = vpop.f32.mrb[0].mxu0
  %451 = vdwg.mxu0
  %v452 = vmax.f32 %v390, 0.0
  %v453 = vmax.f32 %v393, 0.0
  %v454 = vmax.f32 %v398, 0.0
  %v455 = vmax.f32 %v401, 0.0
  %v456 = vmax.f32 %v406, 0.0
  %v457 = vmax.f32 %v409, 0.0
  %v458 = vmax.f32 %v414, 0.0
  %v459 = vmax.f32 %v417, 0.0
  %v460 = vmax.f32 %v422, 0.0
  %v461 = vmax.f32 %v425, 0.0
  %v462 = vmax.f32 %v430, 0.0
  %v463 = vmax.f32 %v433, 0.0
  %v464 = vmax.f32 %v438, 0.0
  %v465 = vmax.f32 %v441, 0.0
  %v466 = vmax.f32 %v446, 0.0
  %v467 = vmax.f32 %v449, 0.0
  %v468 = vpack.c.bf16 %v453, %v452
  %v469 = vpack.c.bf16 %v455, %v454
  %v470 = vpack.c.bf16 %v457, %v456
  %v471 = vpack.c.bf16 %v459, %v458
  %v472 = vpack.c.bf16 %v461, %v460
  %v473 = vpack.c.bf16 %v463, %v462
  %v474 = vpack.c.bf16 %v465, %v464
  %v475 = vpack.c.bf16 %v467, %v466
  %v476 = vld [vmem:[%s4] sm:$0xf]
  %v477 = vld [vmem:[%s4 + $0x4] sm:$0xf]
  %v478 = vld [vmem:[%s4 + $0x8] sm:$0xf]
  %v479 = vld [vmem:[%s4 + $0xc] sm:$0xf]
  %v480 = vld [vmem:[%s4 + $0x10] sm:$0xf]
  %v481 = vld [vmem:[%s4 + $0x14] sm:$0xf]
  %v482 = vld [vmem:[%s4 + $0x18] sm:$0xf]
  %v483 = vld [vmem:[%s4 + $0x1c] sm:$0xf]
  %v484 = vld [vmem:[%s4 + $0x20] sm:$0xf]
  %v485 = vld [vmem:[%s4 + $0x24] sm:$0xf]
  %v486 = vld [vmem:[%s4 + $0x28] sm:$0xf]
  %v487 = vld [vmem:[%s4 + $0x2c] sm:$0xf]
  %v488 = vld [vmem:[%s4 + $0x30] sm:$0xf]
  %v489 = vld [vmem:[%s4 + $0x34] sm:$0xf]
  %v490 = vld [vmem:[%s4 + $0x38] sm:$0xf]
  %v491 = vld [vmem:[%s4 + $0x3c] sm:$0xf]
  %v492 = vld [vmem:[%s5] sm:$0xff]
  %v493 = vld [vmem:[%s5 + $0x8] sm:$0xff]
  %v494 = vld [vmem:[%s5 + $0x10] sm:$0xff]
  %v495 = vld [vmem:[%s5 + $0x18] sm:$0xff]
  %v496 = vld [vmem:[%s5 + $0x20] sm:$0xff]
  %v497 = vld [vmem:[%s5 + $0x28] sm:$0xff]
  %v498 = vld [vmem:[%s5 + $0x30] sm:$0xff]
  %v499 = vld [vmem:[%s5 + $0x38] sm:$0xff]
  %v500 = vld [vmem:[%s5 + $0x40] sm:$0xff]
  %v501 = vld [vmem:[%s5 + $0x48] sm:$0xff]
  %v502 = vld [vmem:[%s5 + $0x50] sm:$0xff]
  %v503 = vld [vmem:[%s5 + $0x58] sm:$0xff]
  %v504 = vld [vmem:[%s5 + $0x60] sm:$0xff]
  %v505 = vld [vmem:[%s5 + $0x68] sm:$0xff]
  %v506 = vld [vmem:[%s5 + $0x70] sm:$0xff]
  %v507 = vld [vmem:[%s5 + $0x78] sm:$0xff]
  %v524 = vunpack.c.l.b16 %v476
  %v525 = vunpack.c.l.b16 %v477
  %v526 = vunpack.c.l.b16 %v478
  %v527 = vunpack.c.l.b16 %v479
  %v528 = vunpack.c.l.b16 %v480
  %v529 = vunpack.c.l.b16 %v481
  %v530 = vunpack.c.l.b16 %v482
  %v531 = vunpack.c.l.b16 %v483
  %v532 = vunpack.c.l.b16 %v484
  %v533 = vunpack.c.l.b16 %v485
  %v534 = vunpack.c.l.b16 %v486
  %v535 = vunpack.c.l.b16 %v487
  %v536 = vunpack.c.l.b16 %v488
  %v537 = vunpack.c.l.b16 %v489
  %v538 = vunpack.c.l.b16 %v490
  %v539 = vunpack.c.l.b16 %v491
  %v540 = vpack.c.b16 %v525, %v524
  %v541 = vpack.c.b16 %v527, %v526
  %v542 = vpack.c.b16 %v529, %v528
  %v543 = vpack.c.b16 %v531, %v530
  %v544 = vpack.c.b16 %v533, %v532
  %v545 = vpack.c.b16 %v535, %v534
  %v546 = vpack.c.b16 %v537, %v536
  %v547 = vpack.c.b16 %v539, %v538
  %556 = vmatprep.subr.bf16.mxu0 0
  %557 = vmatpush1.bf16.msra.mxu0 %v540
  %558 = vmatprep.subr.bf16.mxu0 0
  %559 = vmatpush1.bf16.msra.mxu0 %v541
  %560 = vmatprep.subr.bf16.mxu0 0
  %561 = vmatpush1.bf16.msra.mxu0 %v542
  %562 = vmatprep.subr.bf16.mxu0 0
  %563 = vmatpush1.bf16.msra.mxu0 %v543
  %564 = vmatprep.subr.bf16.mxu0 0
  %565 = vmatpush1.bf16.msra.mxu0 %v544
  %566 = vmatprep.subr.bf16.mxu0 0
  %567 = vmatpush1.bf16.msra.mxu0 %v545
  %568 = vmatprep.subr.bf16.mxu0 0
  %569 = vmatpush1.bf16.msra.mxu0 %v546
  %570 = vmatprep.subr.bf16.mxu0 0
  %571 = vmatpush1.bf16.msra.mxu0 %v547
  %572 = vmatprep.subr.bf16.mxu0 0
  %573 = vmatpush1.bf16.msra.mxu0 0
  %574 = vmatprep.subr.bf16.mxu0 0
  %575 = vmatpush1.bf16.msra.mxu0 0
  %576 = vmatprep.subr.bf16.mxu0 0
  %577 = vmatpush1.bf16.msra.mxu0 0
  %578 = vmatprep.subr.bf16.mxu0 0
  %579 = vmatpush1.bf16.msra.mxu0 0
  %580 = vmatprep.subr.bf16.mxu0 0
  %581 = vmatpush1.bf16.msra.mxu0 0
  %582 = vmatprep.subr.bf16.mxu0 0
  %583 = vmatpush1.bf16.msra.mxu0 0
  %584 = vmatprep.subr.bf16.mxu0 0
  %585 = vmatpush1.bf16.msra.mxu0 0
  %586 = vmatprep.subr.bf16.mxu0 0
  %587 = vmatpush1.bf16.msra.mxu0 0
  %588 = vmatprep.mubr.bf16.mxu0 0
  %589 = vmatmul.mubr.bf16.gmra.mrb[0].mxu0 %v468
  %v590 = vpop.f32.mrb[0].mxu0
  %v591 = vadd.f32 0.0, %v590
  %v592 = vpop.f32.mrb[0].mxu0
  %v593 = vpop.f32.mrb[0].mxu0
  %v594 = vadd.f32 0.0, %v593
  %v595 = vpop.f32.mrb[0].mxu0
  %596 = vmatprep.mubr.bf16.mxu0 0
  %597 = vmatmul.mubr.bf16.gmra.mrb[0].mxu0 %v469
  %v598 = vpop.f32.mrb[0].mxu0
  %v599 = vadd.f32 0.0, %v598
  %v600 = vpop.f32.mrb[0].mxu0
  %v601 = vpop.f32.mrb[0].mxu0
  %v602 = vadd.f32 0.0, %v601
  %v603 = vpop.f32.mrb[0].mxu0
  %604 = vmatprep.mubr.bf16.mxu0 0
  %605 = vmatmul.mubr.bf16.gmra.mrb[0].mxu0 %v470
  %v606 = vpop.f32.mrb[0].mxu0
  %v607 = vadd.f32 0.0, %v606
  %v608 = vpop.f32.mrb[0].mxu0
  %v609 = vpop.f32.mrb[0].mxu0
  %v610 = vadd.f32 0.0, %v609
  %v611 = vpop.f32.mrb[0].mxu0
  %612 = vmatprep.mubr.bf16.mxu0 0
  %613 = vmatmul.mubr.bf16.gmra.mrb[0].mxu0 %v471
  %v614 = vpop.f32.mrb[0].mxu0
  %v615 = vadd.f32 0.0, %v614
  %v616 = vpop.f32.mrb[0].mxu0
  %v617 = vpop.f32.mrb[0].mxu0
  %v618 = vadd.f32 0.0, %v617
  %v619 = vpop.f32.mrb[0].mxu0
  %620 = vmatprep.mubr.bf16.mxu0 0
  %621 = vmatmul.mubr.bf16.gmra.mrb[0].mxu0 %v472
  %v622 = vpop.f32.mrb[0].mxu0
  %v623 = vadd.f32 0.0, %v622
  %v624 = vpop.f32.mrb[0].mxu0
  %v625 = vpop.f32.mrb[0].mxu0
  %v626 = vadd.f32 0.0, %v625
  %v627 = vpop.f32.mrb[0].mxu0
  %628 = vmatprep.mubr.bf16.mxu0 0
  %629 = vmatmul.mubr.bf16.gmra.mrb[0].mxu0 %v473
  %v630 = vpop.f32.mrb[0].mxu0
  %v631 = vadd.f32 0.0, %v630
  %v632 = vpop.f32.mrb[0].mxu0
  %v633 = vpop.f32.mrb[0].mxu0
  %v634 = vadd.f32 0.0, %v633
  %v635 = vpop.f32.mrb[0].mxu0
  %636 = vmatprep.mubr.bf16.mxu0 0
  %637 = vmatmul.mubr.bf16.gmra.mrb[0].mxu0 %v474
  %v638 = vpop.f32.mrb[0].mxu0
  %v639 = vadd.f32 0.0, %v638
  %v640 = vpop.f32.mrb[0].mxu0
  %v641 = vpop.f32.mrb[0].mxu0
  %v642 = vadd.f32 0.0, %v641
  %v643 = vpop.f32.mrb[0].mxu0
  %644 = vmatprep.mubr.bf16.mxu0 0
  %645 = vmatmul.mubr.bf16.gmra.mrb[0].mxu0 %v475
  %v646 = vpop.f32.mrb[0].mxu0
  %v647 = vadd.f32 0.0, %v646
  %v648 = vpop.f32.mrb[0].mxu0
  %v649 = vpop.f32.mrb[0].mxu0
  %v650 = vadd.f32 0.0, %v649
  %v651 = vpop.f32.mrb[0].mxu0
  %652 = vdwg.mxu0
  %v653 = vpack.c.bf16 %v594, %v591
  %v654 = vpack.c.bf16 %v602, %v599
  %v655 = vpack.c.bf16 %v610, %v607
  %v656 = vpack.c.bf16 %v618, %v615
  %v657 = vpack.c.bf16 %v626, %v623
  %v658 = vpack.c.bf16 %v634, %v631
  %v659 = vpack.c.bf16 %v642, %v639
  %v660 = vpack.c.bf16 %v650, %v647
  %661 = vmatprep.subr.bf16.mxu0 0
  %662 = vmatpush1.bf16.msra.mxu0 %v653
  %663 = vmatprep.subr.bf16.mxu0 0
  %664 = vmatpush1.bf16.msra.mxu0 %v654
  %665 = vmatprep.subr.bf16.mxu0 0
  %666 = vmatpush1.bf16.msra.mxu0 %v655
  %667 = vmatprep.subr.bf16.mxu0 0
  %668 = vmatpush1.bf16.msra.mxu0 %v656
  %669 = vmatprep.subr.bf16.mxu0 0
  %670 = vmatpush1.bf16.msra.mxu0 %v657
  %671 = vmatprep.subr.bf16.mxu0 0
  %672 = vmatpush1.bf16.msra.mxu0 %v658
  %673 = vmatprep.subr.bf16.mxu0 0
  %674 = vmatpush1.bf16.msra.mxu0 %v659
  %675 = vmatprep.subr.bf16.mxu0 0
  %676 = vmatpush1.bf16.msra.mxu0 %v660
  %677 = vmatprep.subr.bf16.mxu0 0
  %678 = vmatpush1.bf16.msra.mxu0 0
  %679 = vmatprep.subr.bf16.mxu0 0
  %680 = vmatpush1.bf16.msra.mxu0 0
  %681 = vmatprep.subr.bf16.mxu0 0
  %682 = vmatpush1.bf16.msra.mxu0 0
  %683 = vmatprep.subr.bf16.mxu0 0
  %684 = vmatpush1.bf16.msra.mxu0 0
  %685 = vmatprep.subr.bf16.mxu0 0
  %686 = vmatpush1.bf16.msra.mxu0 0
  %687 = vmatprep.subr.bf16.mxu0 0
  %688 = vmatpush1.bf16.msra.mxu0 0
  %689 = vmatprep.subr.bf16.mxu0 0
  %690 = vmatpush1.bf16.msra.mxu0 0
  %691 = vmatprep.subr.bf16.mxu0 0
  %692 = vmatpush1.bf16.msra.mxu0 0
  %693 = vmatprep.mubr.bf16.mxu0 0
  %694 = vmatmul.mubr.bf16.gmra.mrb[0].mxu0 %v339
  %v695 = vpop.f32.mrb[0].mxu0
  %v696 = vadd.f32 %v492, %v695
  %v697 = vpop.f32.mrb[0].mxu0
  %v698 = vpop.f32.mrb[0].mxu0
  %v699 = vadd.f32 %v493, %v698
  %v700 = vpop.f32.mrb[0].mxu0
  %701 = vmatprep.mubr.bf16.mxu0 0
  %702 = vmatmul.mubr.bf16.gmra.mrb[0].mxu0 %v340
  %v703 = vpop.f32.mrb[0].mxu0
  %v704 = vadd.f32 %v494, %v703
  %v705 = vpop.f32.mrb[0].mxu0
  %v706 = vpop.f32.mrb[0].mxu0
  %v707 = vadd.f32 %v495, %v706
  %v708 = vpop.f32.mrb[0].mxu0
  %709 = vmatprep.mubr.bf16.mxu0 0
  %710 = vmatmul.mubr.bf16.gmra.mrb[0].mxu0 %v341
  %v711 = vpop.f32.mrb[0].mxu0
  %v712 = vadd.f32 %v496, %v711
  %v713 = vpop.f32.mrb[0].mxu0
  %v714 = vpop.f32.mrb[0].mxu0
  %v715 = vadd.f32 %v497, %v714
  %v716 = vpop.f32.mrb[0].mxu0
  %717 = vmatprep.mubr.bf16.mxu0 0
  %718 = vmatmul.mubr.bf16.gmra.mrb[0].mxu0 %v342
  %v719 = vpop.f32.mrb[0].mxu0
  %v720 = vadd.f32 %v498, %v719
  %v721 = vpop.f32.mrb[0].mxu0
  %v722 = vpop.f32.mrb[0].mxu0
  %v723 = vadd.f32 %v499, %v722
  %v724 = vpop.f32.mrb[0].mxu0
  %725 = vmatprep.mubr.bf16.mxu0 0
  %726 = vmatmul.mubr.bf16.gmra.mrb[0].mxu0 %v343
  %v727 = vpop.f32.mrb[0].mxu0
  %v728 = vadd.f32 %v500, %v727
  %v729 = vpop.f32.mrb[0].mxu0
  %v730 = vpop.f32.mrb[0].mxu0
  %v731 = vadd.f32 %v501, %v730
  %v732 = vpop.f32.mrb[0].mxu0
  %733 = vmatprep.mubr.bf16.mxu0 0
  %734 = vmatmul.mubr.bf16.gmra.mrb[0].mxu0 %v344
  %v735 = vpop.f32.mrb[0].mxu0
  %v736 = vadd.f32 %v502, %v735
  %v737 = vpop.f32.mrb[0].mxu0
  %v738 = vpop.f32.mrb[0].mxu0
  %v739 = vadd.f32 %v503, %v738
  %v740 = vpop.f32.mrb[0].mxu0
  %741 = vmatprep.mubr.bf16.mxu0 0
  %742 = vmatmul.mubr.bf16.gmra.mrb[0].mxu0 %v345
  %v743 = vpop.f32.mrb[0].mxu0
  %v744 = vadd.f32 %v504, %v743
  %v745 = vpop.f32.mrb[0].mxu0
  %v746 = vpop.f32.mrb[0].mxu0
  %v747 = vadd.f32 %v505, %v746
  %v748 = vpop.f32.mrb[0].mxu0
  %749 = vmatprep.mubr.bf16.mxu0 0
  %750 = vmatmul.mubr.bf16.gmra.mrb[0].mxu0 %v346
  %v751 = vpop.f32.mrb[0].mxu0
  %v752 = vadd.f32 %v506, %v751
  %v753 = vpop.f32.mrb[0].mxu0
  %v754 = vpop.f32.mrb[0].mxu0
  %v755 = vadd.f32 %v507, %v754
  %v756 = vpop.f32.mrb[0].mxu0
  %757 = vdwg.mxu0
  %v758 = vmax.f32 %v696, 0.0
  %v759 = vmax.f32 %v699, 0.0
  %v760 = vmax.f32 %v704, 0.0
  %v761 = vmax.f32 %v707, 0.0
  %v762 = vmax.f32 %v712, 0.0
  %v763 = vmax.f32 %v715, 0.0
  %v764 = vmax.f32 %v720, 0.0
  %v765 = vmax.f32 %v723, 0.0
  %v766 = vmax.f32 %v728, 0.0
  %v767 = vmax.f32 %v731, 0.0
  %v768 = vmax.f32 %v736, 0.0
  %v769 = vmax.f32 %v739, 0.0
  %v770 = vmax.f32 %v744, 0.0
  %v771 = vmax.f32 %v747, 0.0
  %v772 = vmax.f32 %v752, 0.0
  %v773 = vmax.f32 %v755, 0.0
  %v774 = vpack.c.bf16 %v759, %v758
  %v775 = vpack.c.bf16 %v761, %v760
  %v776 = vpack.c.bf16 %v763, %v762
  %v777 = vpack.c.bf16 %v765, %v764
  %v778 = vpack.c.bf16 %v767, %v766
  %v779 = vpack.c.bf16 %v769, %v768
  %v780 = vpack.c.bf16 %v771, %v770
  %v781 = vpack.c.bf16 %v773, %v772
  %v782 = vld [vmem:[%s6] sm:$0xf]
  %v783 = vld [vmem:[%s6 + $0x4] sm:$0xf]
  %v784 = vld [vmem:[%s6 + $0x8] sm:$0xf]
  %v785 = vld [vmem:[%s6 + $0xc] sm:$0xf]
  %v786 = vld [vmem:[%s6 + $0x10] sm:$0xf]
  %v787 = vld [vmem:[%s6 + $0x14] sm:$0xf]
  %v788 = vld [vmem:[%s6 + $0x18] sm:$0xf]
  %v789 = vld [vmem:[%s6 + $0x1c] sm:$0xf]
  %v790 = vld [vmem:[%s6 + $0x20] sm:$0xf]
  %v791 = vld [vmem:[%s6 + $0x24] sm:$0xf]
  %v792 = vld [vmem:[%s6 + $0x28] sm:$0xf]
  %v793 = vld [vmem:[%s6 + $0x2c] sm:$0xf]
  %v794 = vld [vmem:[%s6 + $0x30] sm:$0xf]
  %v795 = vld [vmem:[%s6 + $0x34] sm:$0xf]
  %v796 = vld [vmem:[%s6 + $0x38] sm:$0xf]
  %v797 = vld [vmem:[%s6 + $0x3c] sm:$0xf]
  %v798 = vld [vmem:[%s7] sm:$0xff]
  %v799 = vld [vmem:[%s7 + $0x8] sm:$0xff]
  %v800 = vld [vmem:[%s7 + $0x10] sm:$0xff]
  %v801 = vld [vmem:[%s7 + $0x18] sm:$0xff]
  %v802 = vld [vmem:[%s7 + $0x20] sm:$0xff]
  %v803 = vld [vmem:[%s7 + $0x28] sm:$0xff]
  %v804 = vld [vmem:[%s7 + $0x30] sm:$0xff]
  %v805 = vld [vmem:[%s7 + $0x38] sm:$0xff]
  %v806 = vld [vmem:[%s7 + $0x40] sm:$0xff]
  %v807 = vld [vmem:[%s7 + $0x48] sm:$0xff]
  %v808 = vld [vmem:[%s7 + $0x50] sm:$0xff]
  %v809 = vld [vmem:[%s7 + $0x58] sm:$0xff]
  %v810 = vld [vmem:[%s7 + $0x60] sm:$0xff]
  %v811 = vld [vmem:[%s7 + $0x68] sm:$0xff]
  %v812 = vld [vmem:[%s7 + $0x70] sm:$0xff]
  %v813 = vld [vmem:[%s7 + $0x78] sm:$0xff]
  %v830 = vunpack.c.l.b16 %v782
  %v831 = vunpack.c.l.b16 %v783
  %v832 = vunpack.c.l.b16 %v784
  %v833 = vunpack.c.l.b16 %v785
  %v834 = vunpack.c.l.b16 %v786
  %v835 = vunpack.c.l.b16 %v787
  %v836 = vunpack.c.l.b16 %v788
  %v837 = vunpack.c.l.b16 %v789
  %v838 = vunpack.c.l.b16 %v790
  %v839 = vunpack.c.l.b16 %v791
  %v840 = vunpack.c.l.b16 %v792
  %v841 = vunpack.c.l.b16 %v793
  %v842 = vunpack.c.l.b16 %v794
  %v843 = vunpack.c.l.b16 %v795
  %v844 = vunpack.c.l.b16 %v796
  %v845 = vunpack.c.l.b16 %v797
  %v846 = vpack.c.b16 %v831, %v830
  %v847 = vpack.c.b16 %v833, %v832
  %v848 = vpack.c.b16 %v835, %v834
  %v849 = vpack.c.b16 %v837, %v836
  %v850 = vpack.c.b16 %v839, %v838
  %v851 = vpack.c.b16 %v841, %v840
  %v852 = vpack.c.b16 %v843, %v842
  %v853 = vpack.c.b16 %v845, %v844
  %862 = vmatprep.subr.bf16.mxu0 0
  %863 = vmatpush1.bf16.msra.mxu0 %v846
  %864 = vmatprep.subr.bf16.mxu0 0
  %865 = vmatpush1.bf16.msra.mxu0 %v847
  %866 = vmatprep.subr.bf16.mxu0 0
  %867 = vmatpush1.bf16.msra.mxu0 %v848
  %868 = vmatprep.subr.bf16.mxu0 0
  %869 = vmatpush1.bf16.msra.mxu0 %v849
  %870 = vmatprep.subr.bf16.mxu0 0
  %871 = vmatpush1.bf16.msra.mxu0 %v850
  %872 = vmatprep.subr.bf16.mxu0 0
  %873 = vmatpush1.bf16.msra.mxu0 %v851
  %874 = vmatprep.subr.bf16.mxu0 0
  %875 = vmatpush1.bf16.msra.mxu0 %v852
  %876 = vmatprep.subr.bf16.mxu0 0
  %877 = vmatpush1.bf16.msra.mxu0 %v853
  %878 = vmatprep.subr.bf16.mxu0 0
  %879 = vmatpush1.bf16.msra.mxu0 0
  %880 = vmatprep.subr.bf16.mxu0 0
  %881 = vmatpush1.bf16.msra.mxu0 0
  %882 = vmatprep.subr.bf16.mxu0 0
  %883 = vmatpush1.bf16.msra.mxu0 0
  %884 = vmatprep.subr.bf16.mxu0 0
  %885 = vmatpush1.bf16.msra.mxu0 0
  %886 = vmatprep.subr.bf16.mxu0 0
  %887 = vmatpush1.bf16.msra.mxu0 0
  %888 = vmatprep.subr.bf16.mxu0 0
  %889 = vmatpush1.bf16.msra.mxu0 0
  %890 = vmatprep.subr.bf16.mxu0 0
  %891 = vmatpush1.bf16.msra.mxu0 0
  %892 = vmatprep.subr.bf16.mxu0 0
  %893 = vmatpush1.bf16.msra.mxu0 0
  %894 = vmatprep.mubr.bf16.mxu0 0
  %895 = vmatmul.mubr.bf16.gmra.mrb[0].mxu0 %v774
  %v896 = vpop.f32.mrb[0].mxu0
  %v897 = vadd.f32 0.0, %v896
  %v898 = vpop.f32.mrb[0].mxu0
  %v899 = vpop.f32.mrb[0].mxu0
  %v900 = vadd.f32 0.0, %v899
  %v901 = vpop.f32.mrb[0].mxu0
  %902 = vmatprep.mubr.bf16.mxu0 0
  %903 = vmatmul.mubr.bf16.gmra.mrb[0].mxu0 %v775
  %v904 = vpop.f32.mrb[0].mxu0
  %v905 = vadd.f32 0.0, %v904
  %v906 = vpop.f32.mrb[0].mxu0
  %v907 = vpop.f32.mrb[0].mxu0
  %v908 = vadd.f32 0.0, %v907
  %v909 = vpop.f32.mrb[0].mxu0
  %910 = vmatprep.mubr.bf16.mxu0 0
  %911 = vmatmul.mubr.bf16.gmra.mrb[0].mxu0 %v776
  %v912 = vpop.f32.mrb[0].mxu0
  %v913 = vadd.f32 0.0, %v912
  %v914 = vpop.f32.mrb[0].mxu0
  %v915 = vpop.f32.mrb[0].mxu0
  %v916 = vadd.f32 0.0, %v915
  %v917 = vpop.f32.mrb[0].mxu0
  %918 = vmatprep.mubr.bf16.mxu0 0
  %919 = vmatmul.mubr.bf16.gmra.mrb[0].mxu0 %v777
  %v920 = vpop.f32.mrb[0].mxu0
  %v921 = vadd.f32 0.0, %v920
  %v922 = vpop.f32.mrb[0].mxu0
  %v923 = vpop.f32.mrb[0].mxu0
  %v924 = vadd.f32 0.0, %v923
  %v925 = vpop.f32.mrb[0].mxu0
  %926 = vmatprep.mubr.bf16.mxu0 0
  %927 = vmatmul.mubr.bf16.gmra.mrb[0].mxu0 %v778
  %v928 = vpop.f32.mrb[0].mxu0
  %v929 = vadd.f32 0.0, %v928
  %v930 = vpop.f32.mrb[0].mxu0
  %v931 = vpop.f32.mrb[0].mxu0
  %v932 = vadd.f32 0.0, %v931
  %v933 = vpop.f32.mrb[0].mxu0
  %934 = vmatprep.mubr.bf16.mxu0 0
  %935 = vmatmul.mubr.bf16.gmra.mrb[0].mxu0 %v779
  %v936 = vpop.f32.mrb[0].mxu0
  %v937 = vadd.f32 0.0, %v936
  %v938 = vpop.f32.mrb[0].mxu0
  %v939 = vpop.f32.mrb[0].mxu0
  %v940 = vadd.f32 0.0, %v939
  %v941 = vpop.f32.mrb[0].mxu0
  %942 = vmatprep.mubr.bf16.mxu0 0
  %943 = vmatmul.mubr.bf16.gmra.mrb[0].mxu0 %v780
  %v944 = vpop.f32.mrb[0].mxu0
  %v945 = vadd.f32 0.0, %v944
  %v946 = vpop.f32.mrb[0].mxu0
  %v947 = vpop.f32.mrb[0].mxu0
  %v948 = vadd.f32 0.0, %v947
  %v949 = vpop.f32.mrb[0].mxu0
  %950 = vmatprep.mubr.bf16.mxu0 0
  %951 = vmatmul.mubr.bf16.gmra.mrb[0].mxu0 %v781
  %v952 = vpop.f32.mrb[0].mxu0
  %v953 = vadd.f32 0.0, %v952
  %v954 = vpop.f32.mrb[0].mxu0
  %v955 = vpop.f32.mrb[0].mxu0
  %v956 = vadd.f32 0.0, %v955
  %v957 = vpop.f32.mrb[0].mxu0
  %958 = vdwg.mxu0
  %v959 = vpack.c.bf16 %v900, %v897
  %v960 = vpack.c.bf16 %v908, %v905
  %v961 = vpack.c.bf16 %v916, %v913
  %v962 = vpack.c.bf16 %v924, %v921
  %v963 = vpack.c.bf16 %v932, %v929
  %v964 = vpack.c.bf16 %v940, %v937
  %v965 = vpack.c.bf16 %v948, %v945
  %v966 = vpack.c.bf16 %v956, %v953
  %967 = vmatprep.subr.bf16.mxu0 0
  %968 = vmatpush1.bf16.msra.mxu0 %v959
  %969 = vmatprep.subr.bf16.mxu0 0
  %970 = vmatpush1.bf16.msra.mxu0 %v960
  %971 = vmatprep.subr.bf16.mxu0 0
  %972 = vmatpush1.bf16.msra.mxu0 %v961
  %973 = vmatprep.subr.bf16.mxu0 0
  %974 = vmatpush1.bf16.msra.mxu0 %v962
  %975 = vmatprep.subr.bf16.mxu0 0
  %976 = vmatpush1.bf16.msra.mxu0 %v963
  %977 = vmatprep.subr.bf16.mxu0 0
  %978 = vmatpush1.bf16.msra.mxu0 %v964
  %979 = vmatprep.subr.bf16.mxu0 0
  %980 = vmatpush1.bf16.msra.mxu0 %v965
  %981 = vmatprep.subr.bf16.mxu0 0
  %982 = vmatpush1.bf16.msra.mxu0 %v966
  %983 = vmatprep.subr.bf16.mxu0 0
  %984 = vmatpush1.bf16.msra.mxu0 0
  %985 = vmatprep.subr.bf16.mxu0 0
  %986 = vmatpush1.bf16.msra.mxu0 0
  %987 = vmatprep.subr.bf16.mxu0 0
  %988 = vmatpush1.bf16.msra.mxu0 0
  %989 = vmatprep.subr.bf16.mxu0 0
  %990 = vmatpush1.bf16.msra.mxu0 0
  %991 = vmatprep.subr.bf16.mxu0 0
  %992 = vmatpush1.bf16.msra.mxu0 0
  %993 = vmatprep.subr.bf16.mxu0 0
  %994 = vmatpush1.bf16.msra.mxu0 0
  %995 = vmatprep.subr.bf16.mxu0 0
  %996 = vmatpush1.bf16.msra.mxu0 0
  %997 = vmatprep.subr.bf16.mxu0 0
  %998 = vmatpush1.bf16.msra.mxu0 0
  %999 = vmatprep.mubr.bf16.mxu0 0
  %1000 = vmatmul.mubr.bf16.gmra.mrb[0].mxu0 %v339
  %v1001 = vpop.f32.mrb[0].mxu0
  %v1002 = vadd.f32 %v798, %v1001
  %v1003 = vpop.f32.mrb[0].mxu0
  %v1004 = vpop.f32.mrb[0].mxu0
  %v1005 = vadd.f32 %v799, %v1004
  %v1006 = vpop.f32.mrb[0].mxu0
  %1007 = vmatprep.mubr.bf16.mxu0 0
  %1008 = vmatmul.mubr.bf16.gmra.mrb[0].mxu0 %v340
  %v1009 = vpop.f32.mrb[0].mxu0
  %v1010 = vadd.f32 %v800, %v1009
  %v1011 = vpop.f32.mrb[0].mxu0
  %v1012 = vpop.f32.mrb[0].mxu0
  %v1013 = vadd.f32 %v801, %v1012
  %v1014 = vpop.f32.mrb[0].mxu0
  %1015 = vmatprep.mubr.bf16.mxu0 0
  %1016 = vmatmul.mubr.bf16.gmra.mrb[0].mxu0 %v341
  %v1017 = vpop.f32.mrb[0].mxu0
  %v1018 = vadd.f32 %v802, %v1017
  %v1019 = vpop.f32.mrb[0].mxu0
  %v1020 = vpop.f32.mrb[0].mxu0
  %v1021 = vadd.f32 %v803, %v1020
  %v1022 = vpop.f32.mrb[0].mxu0
  %1023 = vmatprep.mubr.bf16.mxu0 0
  %1024 = vmatmul.mubr.bf16.gmra.mrb[0].mxu0 %v342
  %v1025 = vpop.f32.mrb[0].mxu0
  %v1026 = vadd.f32 %v804, %v1025
  %v1027 = vpop.f32.mrb[0].mxu0
  %v1028 = vpop.f32.mrb[0].mxu0
  %v1029 = vadd.f32 %v805, %v1028
  %v1030 = vpop.f32.mrb[0].mxu0
  %1031 = vmatprep.mubr.bf16.mxu0 0
  %1032 = vmatmul.mubr.bf16.gmra.mrb[0].mxu0 %v343
  %v1033 = vpop.f32.mrb[0].mxu0
  %v1034 = vadd.f32 %v806, %v1033
  %v1035 = vpop.f32.mrb[0].mxu0
  %v1036 = vpop.f32.mrb[0].mxu0
  %v1037 = vadd.f32 %v807, %v1036
  %v1038 = vpop.f32.mrb[0].mxu0
  %1039 = vmatprep.mubr.bf16.mxu0 0
  %1040 = vmatmul.mubr.bf16.gmra.mrb[0].mxu0 %v344
  %v1041 = vpop.f32.mrb[0].mxu0
  %v1042 = vadd.f32 %v808, %v1041
  %v1043 = vpop.f32.mrb[0].mxu0
  %v1044 = vpop.f32.mrb[0].mxu0
  %v1045 = vadd.f32 %v809, %v1044
  %v1046 = vpop.f32.mrb[0].mxu0
  %1047 = vmatprep.mubr.bf16.mxu0 0
  %1048 = vmatmul.mubr.bf16.gmra.mrb[0].mxu0 %v345
  %v1049 = vpop.f32.mrb[0].mxu0
  %v1050 = vadd.f32 %v810, %v1049
  %v1051 = vpop.f32.mrb[0].mxu0
  %v1052 = vpop.f32.mrb[0].mxu0
  %v1053 = vadd.f32 %v811, %v1052
  %v1054 = vpop.f32.mrb[0].mxu0
  %1055 = vmatprep.mubr.bf16.mxu0 0
  %1056 = vmatmul.mubr.bf16.gmra.mrb[0].mxu0 %v346
  %v1057 = vpop.f32.mrb[0].mxu0
  %v1058 = vadd.f32 %v812, %v1057
  %v1059 = vpop.f32.mrb[0].mxu0
  %v1060 = vpop.f32.mrb[0].mxu0
  %v1061 = vadd.f32 %v813, %v1060
  %v1062 = vpop.f32.mrb[0].mxu0
  %1063 = vdwg.mxu0
  %v1064 = vmax.f32 %v1002, 0.0
  %v1065 = vmax.f32 %v1005, 0.0
  %v1066 = vmax.f32 %v1010, 0.0
  %v1067 = vmax.f32 %v1013, 0.0
  %v1068 = vmax.f32 %v1018, 0.0
  %v1069 = vmax.f32 %v1021, 0.0
  %v1070 = vmax.f32 %v1026, 0.0
  %v1071 = vmax.f32 %v1029, 0.0
  %v1072 = vmax.f32 %v1034, 0.0
  %v1073 = vmax.f32 %v1037, 0.0
  %v1074 = vmax.f32 %v1042, 0.0
  %v1075 = vmax.f32 %v1045, 0.0
  %v1076 = vmax.f32 %v1050, 0.0
  %v1077 = vmax.f32 %v1053, 0.0
  %v1078 = vmax.f32 %v1058, 0.0
  %v1079 = vmax.f32 %v1061, 0.0
  %v1080 = vpack.c.bf16 %v1065, %v1064
  %v1081 = vpack.c.bf16 %v1067, %v1066
  %v1082 = vpack.c.bf16 %v1069, %v1068
  %v1083 = vpack.c.bf16 %v1071, %v1070
  %v1084 = vpack.c.bf16 %v1073, %v1072
  %v1085 = vpack.c.bf16 %v1075, %v1074
  %v1086 = vpack.c.bf16 %v1077, %v1076
  %v1087 = vpack.c.bf16 %v1079, %v1078
  %v1088 = vld [vmem:[%s8] sm:$0xf]
  %v1089 = vld [vmem:[%s8 + $0x4] sm:$0xf]
  %v1090 = vld [vmem:[%s8 + $0x8] sm:$0xf]
  %v1091 = vld [vmem:[%s8 + $0xc] sm:$0xf]
  %v1092 = vld [vmem:[%s8 + $0x10] sm:$0xf]
  %v1093 = vld [vmem:[%s8 + $0x14] sm:$0xf]
  %v1094 = vld [vmem:[%s8 + $0x18] sm:$0xf]
  %v1095 = vld [vmem:[%s8 + $0x1c] sm:$0xf]
  %v1096 = vld [vmem:[%s8 + $0x20] sm:$0xf]
  %v1097 = vld [vmem:[%s8 + $0x24] sm:$0xf]
  %v1098 = vld [vmem:[%s8 + $0x28] sm:$0xf]
  %v1099 = vld [vmem:[%s8 + $0x2c] sm:$0xf]
  %v1100 = vld [vmem:[%s8 + $0x30] sm:$0xf]
  %v1101 = vld [vmem:[%s8 + $0x34] sm:$0xf]
  %v1102 = vld [vmem:[%s8 + $0x38] sm:$0xf]
  %v1103 = vld [vmem:[%s8 + $0x3c] sm:$0xf]
  %v1104 = vld [vmem:[%s9] sm:$0xff]
  %v1105 = vld [vmem:[%s9 + $0x8] sm:$0xff]
  %v1106 = vld [vmem:[%s9 + $0x10] sm:$0xff]
  %v1107 = vld [vmem:[%s9 + $0x18] sm:$0xff]
  %v1108 = vld [vmem:[%s9 + $0x20] sm:$0xff]
  %v1109 = vld [vmem:[%s9 + $0x28] sm:$0xff]
  %v1110 = vld [vmem:[%s9 + $0x30] sm:$0xff]
  %v1111 = vld [vmem:[%s9 + $0x38] sm:$0xff]
  %v1112 = vld [vmem:[%s9 + $0x40] sm:$0xff]
  %v1113 = vld [vmem:[%s9 + $0x48] sm:$0xff]
  %v1114 = vld [vmem:[%s9 + $0x50] sm:$0xff]
  %v1115 = vld [vmem:[%s9 + $0x58] sm:$0xff]
  %v1116 = vld [vmem:[%s9 + $0x60] sm:$0xff]
  %v1117 = vld [vmem:[%s9 + $0x68] sm:$0xff]
  %v1118 = vld [vmem:[%s9 + $0x70] sm:$0xff]
  %v1119 = vld [vmem:[%s9 + $0x78] sm:$0xff]
  %v1136 = vunpack.c.l.b16 %v1088
  %v1137 = vunpack.c.l.b16 %v1089
  %v1138 = vunpack.c.l.b16 %v1090
  %v1139 = vunpack.c.l.b16 %v1091
  %v1140 = vunpack.c.l.b16 %v1092
  %v1141 = vunpack.c.l.b16 %v1093
  %v1142 = vunpack.c.l.b16 %v1094
  %v1143 = vunpack.c.l.b16 %v1095
  %v1144 = vunpack.c.l.b16 %v1096
  %v1145 = vunpack.c.l.b16 %v1097
  %v1146 = vunpack.c.l.b16 %v1098
  %v1147 = vunpack.c.l.b16 %v1099
  %v1148 = vunpack.c.l.b16 %v1100
  %v1149 = vunpack.c.l.b16 %v1101
  %v1150 = vunpack.c.l.b16 %v1102
  %v1151 = vunpack.c.l.b16 %v1103
  %v1152 = vpack.c.b16 %v1137, %v1136
  %v1153 = vpack.c.b16 %v1139, %v1138
  %v1154 = vpack.c.b16 %v1141, %v1140
  %v1155 = vpack.c.b16 %v1143, %v1142
  %v1156 = vpack.c.b16 %v1145, %v1144
  %v1157 = vpack.c.b16 %v1147, %v1146
  %v1158 = vpack.c.b16 %v1149, %v1148
  %v1159 = vpack.c.b16 %v1151, %v1150
  %1168 = vmatprep.subr.bf16.mxu0 0
  %1169 = vmatpush1.bf16.msra.mxu0 %v1152
  %1170 = vmatprep.subr.bf16.mxu0 0
  %1171 = vmatpush1.bf16.msra.mxu0 %v1153
  %1172 = vmatprep.subr.bf16.mxu0 0
  %1173 = vmatpush1.bf16.msra.mxu0 %v1154
  %1174 = vmatprep.subr.bf16.mxu0 0
  %1175 = vmatpush1.bf16.msra.mxu0 %v1155
  %1176 = vmatprep.subr.bf16.mxu0 0
  %1177 = vmatpush1.bf16.msra.mxu0 %v1156
  %1178 = vmatprep.subr.bf16.mxu0 0
  %1179 = vmatpush1.bf16.msra.mxu0 %v1157
  %1180 = vmatprep.subr.bf16.mxu0 0
  %1181 = vmatpush1.bf16.msra.mxu0 %v1158
  %1182 = vmatprep.subr.bf16.mxu0 0
  %1183 = vmatpush1.bf16.msra.mxu0 %v1159
  %1184 = vmatprep.subr.bf16.mxu0 0
  %1185 = vmatpush1.bf16.msra.mxu0 0
  %1186 = vmatprep.subr.bf16.mxu0 0
  %1187 = vmatpush1.bf16.msra.mxu0 0
  %1188 = vmatprep.subr.bf16.mxu0 0
  %1189 = vmatpush1.bf16.msra.mxu0 0
  %1190 = vmatprep.subr.bf16.mxu0 0
  %1191 = vmatpush1.bf16.msra.mxu0 0
  %1192 = vmatprep.subr.bf16.mxu0 0
  %1193 = vmatpush1.bf16.msra.mxu0 0
  %1194 = vmatprep.subr.bf16.mxu0 0
  %1195 = vmatpush1.bf16.msra.mxu0 0
  %1196 = vmatprep.subr.bf16.mxu0 0
  %1197 = vmatpush1.bf16.msra.mxu0 0
  %1198 = vmatprep.subr.bf16.mxu0 0
  %1199 = vmatpush1.bf16.msra.mxu0 0
  %1200 = vmatprep.mubr.bf16.mxu0 0
  %1201 = vmatmul.mubr.bf16.gmra.mrb[0].mxu0 %v1080
  %v1202 = vpop.f32.mrb[0].mxu0
  %v1203 = vadd.f32 0.0, %v1202
  %v1204 = vpop.f32.mrb[0].mxu0
  %v1205 = vpop.f32.mrb[0].mxu0
  %v1206 = vadd.f32 0.0, %v1205
  %v1207 = vpop.f32.mrb[0].mxu0
  %1208 = vmatprep.mubr.bf16.mxu0 0
  %1209 = vmatmul.mubr.bf16.gmra.mrb[0].mxu0 %v1081
  %v1210 = vpop.f32.mrb[0].mxu0
  %v1211 = vadd.f32 0.0, %v1210
  %v1212 = vpop.f32.mrb[0].mxu0
  %v1213 = vpop.f32.mrb[0].mxu0
  %v1214 = vadd.f32 0.0, %v1213
  %v1215 = vpop.f32.mrb[0].mxu0
  %1216 = vmatprep.mubr.bf16.mxu0 0
  %1217 = vmatmul.mubr.bf16.gmra.mrb[0].mxu0 %v1082
  %v1218 = vpop.f32.mrb[0].mxu0
  %v1219 = vadd.f32 0.0, %v1218
  %v1220 = vpop.f32.mrb[0].mxu0
  %v1221 = vpop.f32.mrb[0].mxu0
  %v1222 = vadd.f32 0.0, %v1221
  %v1223 = vpop.f32.mrb[0].mxu0
  %1224 = vmatprep.mubr.bf16.mxu0 0
  %1225 = vmatmul.mubr.bf16.gmra.mrb[0].mxu0 %v1083
  %v1226 = vpop.f32.mrb[0].mxu0
  %v1227 = vadd.f32 0.0, %v1226
  %v1228 = vpop.f32.mrb[0].mxu0
  %v1229 = vpop.f32.mrb[0].mxu0
  %v1230 = vadd.f32 0.0, %v1229
  %v1231 = vpop.f32.mrb[0].mxu0
  %1232 = vmatprep.mubr.bf16.mxu0 0
  %1233 = vmatmul.mubr.bf16.gmra.mrb[0].mxu0 %v1084
  %v1234 = vpop.f32.mrb[0].mxu0
  %v1235 = vadd.f32 0.0, %v1234
  %v1236 = vpop.f32.mrb[0].mxu0
  %v1237 = vpop.f32.mrb[0].mxu0
  %v1238 = vadd.f32 0.0, %v1237
  %v1239 = vpop.f32.mrb[0].mxu0
  %1240 = vmatprep.mubr.bf16.mxu0 0
  %1241 = vmatmul.mubr.bf16.gmra.mrb[0].mxu0 %v1085
  %v1242 = vpop.f32.mrb[0].mxu0
  %v1243 = vadd.f32 0.0, %v1242
  %v1244 = vpop.f32.mrb[0].mxu0
  %v1245 = vpop.f32.mrb[0].mxu0
  %v1246 = vadd.f32 0.0, %v1245
  %v1247 = vpop.f32.mrb[0].mxu0
  %1248 = vmatprep.mubr.bf16.mxu0 0
  %1249 = vmatmul.mubr.bf16.gmra.mrb[0].mxu0 %v1086
  %v1250 = vpop.f32.mrb[0].mxu0
  %v1251 = vadd.f32 0.0, %v1250
  %v1252 = vpop.f32.mrb[0].mxu0
  %v1253 = vpop.f32.mrb[0].mxu0
  %v1254 = vadd.f32 0.0, %v1253
  %v1255 = vpop.f32.mrb[0].mxu0
  %1256 = vmatprep.mubr.bf16.mxu0 0
  %1257 = vmatmul.mubr.bf16.gmra.mrb[0].mxu0 %v1087
  %v1258 = vpop.f32.mrb[0].mxu0
  %v1259 = vadd.f32 0.0, %v1258
  %v1260 = vpop.f32.mrb[0].mxu0
  %v1261 = vpop.f32.mrb[0].mxu0
  %v1262 = vadd.f32 0.0, %v1261
  %v1263 = vpop.f32.mrb[0].mxu0
  %1264 = vdwg.mxu0
  %v1265 = vpack.c.bf16 %v1206, %v1203
  %v1266 = vpack.c.bf16 %v1214, %v1211
  %v1267 = vpack.c.bf16 %v1222, %v1219
  %v1268 = vpack.c.bf16 %v1230, %v1227
  %v1269 = vpack.c.bf16 %v1238, %v1235
  %v1270 = vpack.c.bf16 %v1246, %v1243
  %v1271 = vpack.c.bf16 %v1254, %v1251
  %v1272 = vpack.c.bf16 %v1262, %v1259
  %1273 = vmatprep.subr.bf16.mxu0 0
  %1274 = vmatpush1.bf16.msra.mxu0 %v1265
  %1275 = vmatprep.subr.bf16.mxu0 0
  %1276 = vmatpush1.bf16.msra.mxu0 %v1266
  %1277 = vmatprep.subr.bf16.mxu0 0
  %1278 = vmatpush1.bf16.msra.mxu0 %v1267
  %1279 = vmatprep.subr.bf16.mxu0 0
  %1280 = vmatpush1.bf16.msra.mxu0 %v1268
  %1281 = vmatprep.subr.bf16.mxu0 0
  %1282 = vmatpush1.bf16.msra.mxu0 %v1269
  %1283 = vmatprep.subr.bf16.mxu0 0
  %1284 = vmatpush1.bf16.msra.mxu0 %v1270
  %1285 = vmatprep.subr.bf16.mxu0 0
  %1286 = vmatpush1.bf16.msra.mxu0 %v1271
  %1287 = vmatprep.subr.bf16.mxu0 0
  %1288 = vmatpush1.bf16.msra.mxu0 %v1272
  %1289 = vmatprep.subr.bf16.mxu0 0
  %1290 = vmatpush1.bf16.msra.mxu0 0
  %1291 = vmatprep.subr.bf16.mxu0 0
  %1292 = vmatpush1.bf16.msra.mxu0 0
  %1293 = vmatprep.subr.bf16.mxu0 0
  %1294 = vmatpush1.bf16.msra.mxu0 0
  %1295 = vmatprep.subr.bf16.mxu0 0
  %1296 = vmatpush1.bf16.msra.mxu0 0
  %1297 = vmatprep.subr.bf16.mxu0 0
  %1298 = vmatpush1.bf16.msra.mxu0 0
  %1299 = vmatprep.subr.bf16.mxu0 0
  %1300 = vmatpush1.bf16.msra.mxu0 0
  %1301 = vmatprep.subr.bf16.mxu0 0
  %1302 = vmatpush1.bf16.msra.mxu0 0
  %1303 = vmatprep.subr.bf16.mxu0 0
  %1304 = vmatpush1.bf16.msra.mxu0 0
  %1305 = vmatprep.mubr.bf16.mxu0 0
  %1306 = vmatmul.mubr.bf16.gmra.mrb[0].mxu0 %v339
  %v1307 = vpop.f32.mrb[0].mxu0
  %v1308 = vadd.f32 %v1104, %v1307
  %v1309 = vpop.f32.mrb[0].mxu0
  %v1310 = vpop.f32.mrb[0].mxu0
  %v1311 = vadd.f32 %v1105, %v1310
  %v1312 = vpop.f32.mrb[0].mxu0
  %1313 = vmatprep.mubr.bf16.mxu0 0
  %1314 = vmatmul.mubr.bf16.gmra.mrb[0].mxu0 %v340
  %v1315 = vpop.f32.mrb[0].mxu0
  %v1316 = vadd.f32 %v1106, %v1315
  %v1317 = vpop.f32.mrb[0].mxu0
  %v1318 = vpop.f32.mrb[0].mxu0
  %v1319 = vadd.f32 %v1107, %v1318
  %v1320 = vpop.f32.mrb[0].mxu0
  %1321 = vmatprep.mubr.bf16.mxu0 0
  %1322 = vmatmul.mubr.bf16.gmra.mrb[0].mxu0 %v341
  %v1323 = vpop.f32.mrb[0].mxu0
  %v1324 = vadd.f32 %v1108, %v1323
  %v1325 = vpop.f32.mrb[0].mxu0
  %v1326 = vpop.f32.mrb[0].mxu0
  %v1327 = vadd.f32 %v1109, %v1326
  %v1328 = vpop.f32.mrb[0].mxu0
  %1329 = vmatprep.mubr.bf16.mxu0 0
  %1330 = vmatmul.mubr.bf16.gmra.mrb[0].mxu0 %v342
  %v1331 = vpop.f32.mrb[0].mxu0
  %v1332 = vadd.f32 %v1110, %v1331
  %v1333 = vpop.f32.mrb[0].mxu0
  %v1334 = vpop.f32.mrb[0].mxu0
  %v1335 = vadd.f32 %v1111, %v1334
  %v1336 = vpop.f32.mrb[0].mxu0
  %1337 = vmatprep.mubr.bf16.mxu0 0
  %1338 = vmatmul.mubr.bf16.gmra.mrb[0].mxu0 %v343
  %v1339 = vpop.f32.mrb[0].mxu0
  %v1340 = vadd.f32 %v1112, %v1339
  %v1341 = vpop.f32.mrb[0].mxu0
  %v1342 = vpop.f32.mrb[0].mxu0
  %v1343 = vadd.f32 %v1113, %v1342
  %v1344 = vpop.f32.mrb[0].mxu0
  %1345 = vmatprep.mubr.bf16.mxu0 0
  %1346 = vmatmul.mubr.bf16.gmra.mrb[0].mxu0 %v344
  %v1347 = vpop.f32.mrb[0].mxu0
  %v1348 = vadd.f32 %v1114, %v1347
  %v1349 = vpop.f32.mrb[0].mxu0
  %v1350 = vpop.f32.mrb[0].mxu0
  %v1351 = vadd.f32 %v1115, %v1350
  %v1352 = vpop.f32.mrb[0].mxu0
  %1353 = vmatprep.mubr.bf16.mxu0 0
  %1354 = vmatmul.mubr.bf16.gmra.mrb[0].mxu0 %v345
  %v1355 = vpop.f32.mrb[0].mxu0
  %v1356 = vadd.f32 %v1116, %v1355
  %v1357 = vpop.f32.mrb[0].mxu0
  %v1358 = vpop.f32.mrb[0].mxu0
  %v1359 = vadd.f32 %v1117, %v1358
  %v1360 = vpop.f32.mrb[0].mxu0
  %1361 = vmatprep.mubr.bf16.mxu0 0
  %1362 = vmatmul.mubr.bf16.gmra.mrb[0].mxu0 %v346
  %v1363 = vpop.f32.mrb[0].mxu0
  %v1364 = vadd.f32 %v1118, %v1363
  %v1365 = vpop.f32.mrb[0].mxu0
  %v1366 = vpop.f32.mrb[0].mxu0
  %v1367 = vadd.f32 %v1119, %v1366
  %v1368 = vpop.f32.mrb[0].mxu0
  %1369 = vdwg.mxu0
  %v1370 = vmax.f32 %v1308, 0.0
  %v1371 = vmax.f32 %v1311, 0.0
  %v1372 = vmax.f32 %v1316, 0.0
  %v1373 = vmax.f32 %v1319, 0.0
  %v1374 = vmax.f32 %v1324, 0.0
  %v1375 = vmax.f32 %v1327, 0.0
  %v1376 = vmax.f32 %v1332, 0.0
  %v1377 = vmax.f32 %v1335, 0.0
  %v1378 = vmax.f32 %v1340, 0.0
  %v1379 = vmax.f32 %v1343, 0.0
  %v1380 = vmax.f32 %v1348, 0.0
  %v1381 = vmax.f32 %v1351, 0.0
  %v1382 = vmax.f32 %v1356, 0.0
  %v1383 = vmax.f32 %v1359, 0.0
  %v1384 = vmax.f32 %v1364, 0.0
  %v1385 = vmax.f32 %v1367, 0.0
  %v1386 = vpack.c.bf16 %v1371, %v1370
  %v1387 = vpack.c.bf16 %v1373, %v1372
  %v1388 = vpack.c.bf16 %v1375, %v1374
  %v1389 = vpack.c.bf16 %v1377, %v1376
  %v1390 = vpack.c.bf16 %v1379, %v1378
  %v1391 = vpack.c.bf16 %v1381, %v1380
  %v1392 = vpack.c.bf16 %v1383, %v1382
  %v1393 = vpack.c.bf16 %v1385, %v1384
  %v1394 = vld [vmem:[%s10] sm:$0xf]
  %v1395 = vld [vmem:[%s10 + $0x4] sm:$0xf]
  %v1396 = vld [vmem:[%s10 + $0x8] sm:$0xf]
  %v1397 = vld [vmem:[%s10 + $0xc] sm:$0xf]
  %v1398 = vld [vmem:[%s10 + $0x10] sm:$0xf]
  %v1399 = vld [vmem:[%s10 + $0x14] sm:$0xf]
  %v1400 = vld [vmem:[%s10 + $0x18] sm:$0xf]
  %v1401 = vld [vmem:[%s10 + $0x1c] sm:$0xf]
  %v1402 = vld [vmem:[%s10 + $0x20] sm:$0xf]
  %v1403 = vld [vmem:[%s10 + $0x24] sm:$0xf]
  %v1404 = vld [vmem:[%s10 + $0x28] sm:$0xf]
  %v1405 = vld [vmem:[%s10 + $0x2c] sm:$0xf]
  %v1406 = vld [vmem:[%s10 + $0x30] sm:$0xf]
  %v1407 = vld [vmem:[%s10 + $0x34] sm:$0xf]
  %v1408 = vld [vmem:[%s10 + $0x38] sm:$0xf]
  %v1409 = vld [vmem:[%s10 + $0x3c] sm:$0xf]
  %v1410 = vld [vmem:[%s11] sm:$0xff]
  %v1411 = vld [vmem:[%s11 + $0x8] sm:$0xff]
  %v1412 = vld [vmem:[%s11 + $0x10] sm:$0xff]
  %v1413 = vld [vmem:[%s11 + $0x18] sm:$0xff]
  %v1414 = vld [vmem:[%s11 + $0x20] sm:$0xff]
  %v1415 = vld [vmem:[%s11 + $0x28] sm:$0xff]
  %v1416 = vld [vmem:[%s11 + $0x30] sm:$0xff]
  %v1417 = vld [vmem:[%s11 + $0x38] sm:$0xff]
  %v1418 = vld [vmem:[%s11 + $0x40] sm:$0xff]
  %v1419 = vld [vmem:[%s11 + $0x48] sm:$0xff]
  %v1420 = vld [vmem:[%s11 + $0x50] sm:$0xff]
  %v1421 = vld [vmem:[%s11 + $0x58] sm:$0xff]
  %v1422 = vld [vmem:[%s11 + $0x60] sm:$0xff]
  %v1423 = vld [vmem:[%s11 + $0x68] sm:$0xff]
  %v1424 = vld [vmem:[%s11 + $0x70] sm:$0xff]
  %v1425 = vld [vmem:[%s11 + $0x78] sm:$0xff]
  %v1442 = vunpack.c.l.b16 %v1394
  %v1443 = vunpack.c.l.b16 %v1395
  %v1444 = vunpack.c.l.b16 %v1396
  %v1445 = vunpack.c.l.b16 %v1397
  %v1446 = vunpack.c.l.b16 %v1398
  %v1447 = vunpack.c.l.b16 %v1399
  %v1448 = vunpack.c.l.b16 %v1400
  %v1449 = vunpack.c.l.b16 %v1401
  %v1450 = vunpack.c.l.b16 %v1402
  %v1451 = vunpack.c.l.b16 %v1403
  %v1452 = vunpack.c.l.b16 %v1404
  %v1453 = vunpack.c.l.b16 %v1405
  %v1454 = vunpack.c.l.b16 %v1406
  %v1455 = vunpack.c.l.b16 %v1407
  %v1456 = vunpack.c.l.b16 %v1408
  %v1457 = vunpack.c.l.b16 %v1409
  %v1458 = vpack.c.b16 %v1443, %v1442
  %v1459 = vpack.c.b16 %v1445, %v1444
  %v1460 = vpack.c.b16 %v1447, %v1446
  %v1461 = vpack.c.b16 %v1449, %v1448
  %v1462 = vpack.c.b16 %v1451, %v1450
  %v1463 = vpack.c.b16 %v1453, %v1452
  %v1464 = vpack.c.b16 %v1455, %v1454
  %v1465 = vpack.c.b16 %v1457, %v1456
  %1474 = vmatprep.subr.bf16.mxu0 0
  %1475 = vmatpush1.bf16.msra.mxu0 %v1458
  %1476 = vmatprep.subr.bf16.mxu0 0
  %1477 = vmatpush1.bf16.msra.mxu0 %v1459
  %1478 = vmatprep.subr.bf16.mxu0 0
  %1479 = vmatpush1.bf16.msra.mxu0 %v1460
  %1480 = vmatprep.subr.bf16.mxu0 0
  %1481 = vmatpush1.bf16.msra.mxu0 %v1461
  %1482 = vmatprep.subr.bf16.mxu0 0
  %1483 = vmatpush1.bf16.msra.mxu0 %v1462
  %1484 = vmatprep.subr.bf16.mxu0 0
  %1485 = vmatpush1.bf16.msra.mxu0 %v1463
  %1486 = vmatprep.subr.bf16.mxu0 0
  %1487 = vmatpush1.bf16.msra.mxu0 %v1464
  %1488 = vmatprep.subr.bf16.mxu0 0
  %1489 = vmatpush1.bf16.msra.mxu0 %v1465
  %1490 = vmatprep.subr.bf16.mxu0 0
  %1491 = vmatpush1.bf16.msra.mxu0 0
  %1492 = vmatprep.subr.bf16.mxu0 0
  %1493 = vmatpush1.bf16.msra.mxu0 0
  %1494 = vmatprep.subr.bf16.mxu0 0
  %1495 = vmatpush1.bf16.msra.mxu0 0
  %1496 = vmatprep.subr.bf16.mxu0 0
  %1497 = vmatpush1.bf16.msra.mxu0 0
  %1498 = vmatprep.subr.bf16.mxu0 0
  %1499 = vmatpush1.bf16.msra.mxu0 0
  %1500 = vmatprep.subr.bf16.mxu0 0
  %1501 = vmatpush1.bf16.msra.mxu0 0
  %1502 = vmatprep.subr.bf16.mxu0 0
  %1503 = vmatpush1.bf16.msra.mxu0 0
  %1504 = vmatprep.subr.bf16.mxu0 0
  %1505 = vmatpush1.bf16.msra.mxu0 0
  %1506 = vmatprep.mubr.bf16.mxu0 0
  %1507 = vmatmul.mubr.bf16.gmra.mrb[0].mxu0 %v1386
  %v1508 = vpop.f32.mrb[0].mxu0
  %v1509 = vadd.f32 0.0, %v1508
  %v1510 = vpop.f32.mrb[0].mxu0
  %v1511 = vpop.f32.mrb[0].mxu0
  %v1512 = vadd.f32 0.0, %v1511
  %v1513 = vpop.f32.mrb[0].mxu0
  %1514 = vmatprep.mubr.bf16.mxu0 0
  %1515 = vmatmul.mubr.bf16.gmra.mrb[0].mxu0 %v1387
  %v1516 = vpop.f32.mrb[0].mxu0
  %v1517 = vadd.f32 0.0, %v1516
  %v1518 = vpop.f32.mrb[0].mxu0
  %v1519 = vpop.f32.mrb[0].mxu0
  %v1520 = vadd.f32 0.0, %v1519
  %v1521 = vpop.f32.mrb[0].mxu0
  %1522 = vmatprep.mubr.bf16.mxu0 0
  %1523 = vmatmul.mubr.bf16.gmra.mrb[0].mxu0 %v1388
  %v1524 = vpop.f32.mrb[0].mxu0
  %v1525 = vadd.f32 0.0, %v1524
  %v1526 = vpop.f32.mrb[0].mxu0
  %v1527 = vpop.f32.mrb[0].mxu0
  %v1528 = vadd.f32 0.0, %v1527
  %v1529 = vpop.f32.mrb[0].mxu0
  %1530 = vmatprep.mubr.bf16.mxu0 0
  %1531 = vmatmul.mubr.bf16.gmra.mrb[0].mxu0 %v1389
  %v1532 = vpop.f32.mrb[0].mxu0
  %v1533 = vadd.f32 0.0, %v1532
  %v1534 = vpop.f32.mrb[0].mxu0
  %v1535 = vpop.f32.mrb[0].mxu0
  %v1536 = vadd.f32 0.0, %v1535
  %v1537 = vpop.f32.mrb[0].mxu0
  %1538 = vmatprep.mubr.bf16.mxu0 0
  %1539 = vmatmul.mubr.bf16.gmra.mrb[0].mxu0 %v1390
  %v1540 = vpop.f32.mrb[0].mxu0
  %v1541 = vadd.f32 0.0, %v1540
  %v1542 = vpop.f32.mrb[0].mxu0
  %v1543 = vpop.f32.mrb[0].mxu0
  %v1544 = vadd.f32 0.0, %v1543
  %v1545 = vpop.f32.mrb[0].mxu0
  %1546 = vmatprep.mubr.bf16.mxu0 0
  %1547 = vmatmul.mubr.bf16.gmra.mrb[0].mxu0 %v1391
  %v1548 = vpop.f32.mrb[0].mxu0
  %v1549 = vadd.f32 0.0, %v1548
  %v1550 = vpop.f32.mrb[0].mxu0
  %v1551 = vpop.f32.mrb[0].mxu0
  %v1552 = vadd.f32 0.0, %v1551
  %v1553 = vpop.f32.mrb[0].mxu0
  %1554 = vmatprep.mubr.bf16.mxu0 0
  %1555 = vmatmul.mubr.bf16.gmra.mrb[0].mxu0 %v1392
  %v1556 = vpop.f32.mrb[0].mxu0
  %v1557 = vadd.f32 0.0, %v1556
  %v1558 = vpop.f32.mrb[0].mxu0
  %v1559 = vpop.f32.mrb[0].mxu0
  %v1560 = vadd.f32 0.0, %v1559
  %v1561 = vpop.f32.mrb[0].mxu0
  %1562 = vmatprep.mubr.bf16.mxu0 0
  %1563 = vmatmul.mubr.bf16.gmra.mrb[0].mxu0 %v1393
  %v1564 = vpop.f32.mrb[0].mxu0
  %v1565 = vadd.f32 0.0, %v1564
  %v1566 = vpop.f32.mrb[0].mxu0
  %v1567 = vpop.f32.mrb[0].mxu0
  %v1568 = vadd.f32 0.0, %v1567
  %v1569 = vpop.f32.mrb[0].mxu0
  %1570 = vdwg.mxu0
  %v1571 = vpack.c.bf16 %v1512, %v1509
  %v1572 = vpack.c.bf16 %v1520, %v1517
  %v1573 = vpack.c.bf16 %v1528, %v1525
  %v1574 = vpack.c.bf16 %v1536, %v1533
  %v1575 = vpack.c.bf16 %v1544, %v1541
  %v1576 = vpack.c.bf16 %v1552, %v1549
  %v1577 = vpack.c.bf16 %v1560, %v1557
  %v1578 = vpack.c.bf16 %v1568, %v1565
  %1579 = vmatprep.subr.bf16.mxu0 0
  %1580 = vmatpush1.bf16.msra.mxu0 %v1571
  %1581 = vmatprep.subr.bf16.mxu0 0
  %1582 = vmatpush1.bf16.msra.mxu0 %v1572
  %1583 = vmatprep.subr.bf16.mxu0 0
  %1584 = vmatpush1.bf16.msra.mxu0 %v1573
  %1585 = vmatprep.subr.bf16.mxu0 0
  %1586 = vmatpush1.bf16.msra.mxu0 %v1574
  %1587 = vmatprep.subr.bf16.mxu0 0
  %1588 = vmatpush1.bf16.msra.mxu0 %v1575
  %1589 = vmatprep.subr.bf16.mxu0 0
  %1590 = vmatpush1.bf16.msra.mxu0 %v1576
  %1591 = vmatprep.subr.bf16.mxu0 0
  %1592 = vmatpush1.bf16.msra.mxu0 %v1577
  %1593 = vmatprep.subr.bf16.mxu0 0
  %1594 = vmatpush1.bf16.msra.mxu0 %v1578
  %1595 = vmatprep.subr.bf16.mxu0 0
  %1596 = vmatpush1.bf16.msra.mxu0 0
  %1597 = vmatprep.subr.bf16.mxu0 0
  %1598 = vmatpush1.bf16.msra.mxu0 0
  %1599 = vmatprep.subr.bf16.mxu0 0
  %1600 = vmatpush1.bf16.msra.mxu0 0
  %1601 = vmatprep.subr.bf16.mxu0 0
  %1602 = vmatpush1.bf16.msra.mxu0 0
  %1603 = vmatprep.subr.bf16.mxu0 0
  %1604 = vmatpush1.bf16.msra.mxu0 0
  %1605 = vmatprep.subr.bf16.mxu0 0
  %1606 = vmatpush1.bf16.msra.mxu0 0
  %1607 = vmatprep.subr.bf16.mxu0 0
  %1608 = vmatpush1.bf16.msra.mxu0 0
  %1609 = vmatprep.subr.bf16.mxu0 0
  %1610 = vmatpush1.bf16.msra.mxu0 0
  %1611 = vmatprep.mubr.bf16.mxu0 0
  %1612 = vmatmul.mubr.bf16.gmra.mrb[0].mxu0 %v339
  %v1613 = vpop.f32.mrb[0].mxu0
  %v1614 = vadd.f32 %v1410, %v1613
  %v1615 = vpop.f32.mrb[0].mxu0
  %v1616 = vpop.f32.mrb[0].mxu0
  %v1617 = vadd.f32 %v1411, %v1616
  %v1618 = vpop.f32.mrb[0].mxu0
  %1619 = vmatprep.mubr.bf16.mxu0 0
  %1620 = vmatmul.mubr.bf16.gmra.mrb[0].mxu0 %v340
  %v1621 = vpop.f32.mrb[0].mxu0
  %v1622 = vadd.f32 %v1412, %v1621
  %v1623 = vpop.f32.mrb[0].mxu0
  %v1624 = vpop.f32.mrb[0].mxu0
  %v1625 = vadd.f32 %v1413, %v1624
  %v1626 = vpop.f32.mrb[0].mxu0
  %1627 = vmatprep.mubr.bf16.mxu0 0
  %1628 = vmatmul.mubr.bf16.gmra.mrb[0].mxu0 %v341
  %v1629 = vpop.f32.mrb[0].mxu0
  %v1630 = vadd.f32 %v1414, %v1629
  %v1631 = vpop.f32.mrb[0].mxu0
  %v1632 = vpop.f32.mrb[0].mxu0
  %v1633 = vadd.f32 %v1415, %v1632
  %v1634 = vpop.f32.mrb[0].mxu0
  %1635 = vmatprep.mubr.bf16.mxu0 0
  %1636 = vmatmul.mubr.bf16.gmra.mrb[0].mxu0 %v342
  %v1637 = vpop.f32.mrb[0].mxu0
  %v1638 = vadd.f32 %v1416, %v1637
  %v1639 = vpop.f32.mrb[0].mxu0
  %v1640 = vpop.f32.mrb[0].mxu0
  %v1641 = vadd.f32 %v1417, %v1640
  %v1642 = vpop.f32.mrb[0].mxu0
  %1643 = vmatprep.mubr.bf16.mxu0 0
  %1644 = vmatmul.mubr.bf16.gmra.mrb[0].mxu0 %v343
  %v1645 = vpop.f32.mrb[0].mxu0
  %v1646 = vadd.f32 %v1418, %v1645
  %v1647 = vpop.f32.mrb[0].mxu0
  %v1648 = vpop.f32.mrb[0].mxu0
  %v1649 = vadd.f32 %v1419, %v1648
  %v1650 = vpop.f32.mrb[0].mxu0
  %1651 = vmatprep.mubr.bf16.mxu0 0
  %1652 = vmatmul.mubr.bf16.gmra.mrb[0].mxu0 %v344
  %v1653 = vpop.f32.mrb[0].mxu0
  %v1654 = vadd.f32 %v1420, %v1653
  %v1655 = vpop.f32.mrb[0].mxu0
  %v1656 = vpop.f32.mrb[0].mxu0
  %v1657 = vadd.f32 %v1421, %v1656
  %v1658 = vpop.f32.mrb[0].mxu0
  %1659 = vmatprep.mubr.bf16.mxu0 0
  %1660 = vmatmul.mubr.bf16.gmra.mrb[0].mxu0 %v345
  %v1661 = vpop.f32.mrb[0].mxu0
  %v1662 = vadd.f32 %v1422, %v1661
  %v1663 = vpop.f32.mrb[0].mxu0
  %v1664 = vpop.f32.mrb[0].mxu0
  %v1665 = vadd.f32 %v1423, %v1664
  %v1666 = vpop.f32.mrb[0].mxu0
  %1667 = vmatprep.mubr.bf16.mxu0 0
  %1668 = vmatmul.mubr.bf16.gmra.mrb[0].mxu0 %v346
  %v1669 = vpop.f32.mrb[0].mxu0
  %v1670 = vadd.f32 %v1424, %v1669
  %v1671 = vpop.f32.mrb[0].mxu0
  %v1672 = vpop.f32.mrb[0].mxu0
  %v1673 = vadd.f32 %v1425, %v1672
  %v1674 = vpop.f32.mrb[0].mxu0
  %1675 = vdwg.mxu0
  %v1676 = vsub.f32 0.0, %v1614
  %v1677 = vsub.f32 0.0, %v1617
  %v1678 = vsub.f32 0.0, %v1622
  %v1679 = vsub.f32 0.0, %v1625
  %v1680 = vsub.f32 0.0, %v1630
  %v1681 = vsub.f32 0.0, %v1633
  %v1682 = vsub.f32 0.0, %v1638
  %v1683 = vsub.f32 0.0, %v1641
  %v1684 = vsub.f32 0.0, %v1646
  %v1685 = vsub.f32 0.0, %v1649
  %v1686 = vsub.f32 0.0, %v1654
  %v1687 = vsub.f32 0.0, %v1657
  %v1688 = vsub.f32 0.0, %v1662
  %v1689 = vsub.f32 0.0, %v1665
  %v1690 = vsub.f32 0.0, %v1670
  %v1691 = vsub.f32 0.0, %v1673
  %v1692 = vmul.f32 %v1676, 1.442695
  %v1693 = vpow.pop %v1692
  %v1694 = vmul.f32 %v1677, 1.442695
  %v1695 = vpow.pop %v1694
  %v1696 = vmul.f32 %v1678, 1.442695
  %v1697 = vpow.pop %v1696
  %v1698 = vmul.f32 %v1679, 1.442695
  %v1699 = vpow.pop %v1698
  %v1700 = vmul.f32 %v1680, 1.442695
  %v1701 = vpow.pop %v1700
  %v1702 = vmul.f32 %v1681, 1.442695
  %v1703 = vpow.pop %v1702
  %v1704 = vmul.f32 %v1682, 1.442695
  %v1705 = vpow.pop %v1704
  %v1706 = vmul.f32 %v1683, 1.442695
  %v1707 = vpow.pop %v1706
  %v1708 = vmul.f32 %v1684, 1.442695
  %v1709 = vpow.pop %v1708
  %v1710 = vmul.f32 %v1685, 1.442695
  %v1711 = vpow.pop %v1710
  %v1712 = vmul.f32 %v1686, 1.442695
  %v1713 = vpow.pop %v1712
  %v1714 = vmul.f32 %v1687, 1.442695
  %v1715 = vpow.pop %v1714
  %v1716 = vmul.f32 %v1688, 1.442695
  %v1717 = vpow.pop %v1716
  %v1718 = vmul.f32 %v1689, 1.442695
  %v1719 = vpow.pop %v1718
  %v1720 = vmul.f32 %v1690, 1.442695
  %v1721 = vpow.pop %v1720
  %v1722 = vmul.f32 %v1691, 1.442695
  %v1723 = vpow.pop %v1722
  %v1724 = vadd.f32 %v1693, 1.0
  %v1725 = vadd.f32 %v1695, 1.0
  %v1726 = vadd.f32 %v1697, 1.0
  %v1727 = vadd.f32 %v1699, 1.0
  %v1728 = vadd.f32 %v1701, 1.0
  %v1729 = vadd.f32 %v1703, 1.0
  %v1730 = vadd.f32 %v1705, 1.0
  %v1731 = vadd.f32 %v1707, 1.0
  %v1732 = vadd.f32 %v1709, 1.0
  %v1733 = vadd.f32 %v1711, 1.0
  %v1734 = vadd.f32 %v1713, 1.0
  %v1735 = vadd.f32 %v1715, 1.0
  %v1736 = vadd.f32 %v1717, 1.0
  %v1737 = vadd.f32 %v1719, 1.0
  %v1738 = vadd.f32 %v1721, 1.0
  %v1739 = vadd.f32 %v1723, 1.0
  %v1740 = vrcp.pop %v1724
  %v1741 = vmul.f32 1.0, %v1740
  %v1742 = vrcp.pop %v1725
  %v1743 = vmul.f32 1.0, %v1742
  %v1744 = vrcp.pop %v1726
  %v1745 = vmul.f32 1.0, %v1744
  %v1746 = vrcp.pop %v1727
  %v1747 = vmul.f32 1.0, %v1746
  %v1748 = vrcp.pop %v1728
  %v1749 = vmul.f32 1.0, %v1748
  %v1750 = vrcp.pop %v1729
  %v1751 = vmul.f32 1.0, %v1750
  %v1752 = vrcp.pop %v1730
  %v1753 = vmul.f32 1.0, %v1752
  %v1754 = vrcp.pop %v1731
  %v1755 = vmul.f32 1.0, %v1754
  %v1756 = vrcp.pop %v1732
  %v1757 = vmul.f32 1.0, %v1756
  %v1758 = vrcp.pop %v1733
  %v1759 = vmul.f32 1.0, %v1758
  %v1760 = vrcp.pop %v1734
  %v1761 = vmul.f32 1.0, %v1760
  %v1762 = vrcp.pop %v1735
  %v1763 = vmul.f32 1.0, %v1762
  %v1764 = vrcp.pop %v1736
  %v1765 = vmul.f32 1.0, %v1764
  %v1766 = vrcp.pop %v1737
  %v1767 = vmul.f32 1.0, %v1766
  %v1768 = vrcp.pop %v1738
  %v1769 = vmul.f32 1.0, %v1768
  %v1770 = vrcp.pop %v1739
  %v1771 = vmul.f32 1.0, %v1770
  %1772 = vst [vmem:[%s12] sm:$0xff] %v1741
  %1773 = vst [vmem:[%s12 + $0x8] sm:$0xff] %v1743
  %1774 = vst [vmem:[%s12 + $0x10] sm:$0xff] %v1745
  %1775 = vst [vmem:[%s12 + $0x18] sm:$0xff] %v1747
  %1776 = vst [vmem:[%s12 + $0x20] sm:$0xff] %v1749
  %1777 = vst [vmem:[%s12 + $0x28] sm:$0xff] %v1751
  %1778 = vst [vmem:[%s12 + $0x30] sm:$0xff] %v1753
  %1779 = vst [vmem:[%s12 + $0x38] sm:$0xff] %v1755
  %1780 = vst [vmem:[%s12 + $0x40] sm:$0xff] %v1757
  %1781 = vst [vmem:[%s12 + $0x48] sm:$0xff] %v1759
  %1782 = vst [vmem:[%s12 + $0x50] sm:$0xff] %v1761
  %1783 = vst [vmem:[%s12 + $0x58] sm:$0xff] %v1763
  %1784 = vst [vmem:[%s12 + $0x60] sm:$0xff] %v1765
  %1785 = vst [vmem:[%s12 + $0x68] sm:$0xff] %v1767
  %1786 = vst [vmem:[%s12 + $0x70] sm:$0xff] %v1769
  %1787 = vst [vmem:[%s12 + $0x78] sm:$0xff] %v1771
  // Predicated region
  $region50: #{gcn_forward.1} parent=0 // pred_check
    _
  $region51: #{gcn_forward.1} parent=0 // pred_check_branch
    %1789 = sbr.rel (0) target = $region53
  $region52: #{gcn_forward.1} parent=0 // pred_region
    _
  $region53: #{gcn_forward.1} parent=0 // pred_fallthru
    _
  // Predicated region
  $region54: #{gcn_forward.1} parent=0 // pred_check
    _
  $region55: #{gcn_forward.1} parent=0 // pred_check_branch
    %1791 = sbr.rel (0) target = $region57
  $region56: #{gcn_forward.1} parent=0 // pred_region
    _
  $region57: #{gcn_forward.1} parent=0 // pred_fallthru
    _

</llo_original>
